<compile_context>
chip_gen: v6e
topology: v6e:2x2x1
jax: 0.10.0
libtpu: 0.0.40
codegen_flags: <defaults>
</compile_context>

<pallas_src>
import functools

import jax
import jax.numpy as jnp
from jax import lax
from jax.experimental import pallas as pl
from jax.experimental.pallas import tpu as pltpu


# ----------------------------------------------------------------------------
# helpers
# ----------------------------------------------------------------------------
def _round_up(x, m):
    return (x + m - 1) // m * m


def _cdiv(a, b):
    return (a + b - 1) // b


# ----------------------------------------------------------------------------
# kernel: manual windowed DMA (double-buffered) + per-tap accumulating dots
# ----------------------------------------------------------------------------
def _make_down_kernel(tap_offsets, tile_mf, win, chunk, n_chunks, apply_relu):
    """tap_offsets: 9 tuples (parity_plane_index, static_lane_offset)."""

    def kernel(x_hbm, w_ref, b_ref, o_ref, xbuf, sem):
        # x_hbm : (N, 4, 2C, L)        bf16  HBM space-to-depth planes (flattened)
        # w_ref : (9, Coutp2, 2C)      bf16  per-tap stacked complex weights
        # b_ref : (Coutp2, 1)          f32   stacked complex bias
        # o_ref : (1, Coutp2, tile_mf) bf16  output tile (channel-major, lane dense)
        # xbuf  : (2, 4, 2C, win)      bf16  double-buffered input window (scratch)
        # sem   : DMA semaphores (2,)
        n = pl.program_id(0)
        t = pl.program_id(1)
        nt = pl.num_programs(1)
        slot = t % 2

        def window_copy(tt, sl):
            return pltpu.make_async_copy(
                x_hbm.at[n, :, :, pl.ds(tt * tile_mf, win)],
                xbuf.at[sl],
                sem.at[sl],
            )

        # First tile of each batch fetches its own window.
        @pl.when(t == 0)
        def _():
            window_copy(t, slot).start()

        # Wait for the current tile's window.
        window_copy(t, slot).wait()

        # Prefetch the next tile of this batch into the other slot; overlaps
        # with the compute below.
        @pl.when(t + 1 < nt)
        def _():
            window_copy(t + 1, 1 - slot).start()

        bias = b_ref[...]  # (Coutp2, 1) f32

        # Column-chunked accumulation: per chunk the f32 accumulator
        # (Coutp2, chunk) stays in vregs; 9 small-K MXU dots accumulate into it;
        # a single lane-dense bf16 store per chunk.  All slice starts are static.
        for ci in range(n_chunks):
            c0 = ci * chunk
            acc = None
            for tau, (s, off) in enumerate(tap_offsets):
                x_c = xbuf[slot, s, :, pl.ds(c0 + off, chunk)]      # (2C, chunk)
                part = jnp.dot(w_ref[tau], x_c,
                               preferred_element_type=jnp.float32)  # (Coutp2, chunk)
                acc = part if acc is None else acc + part
            acc = acc + bias
            if apply_relu:
                acc = jnp.maximum(acc, 0.0)                         # complex ReLU
            o_ref[0, :, pl.ds(c0, chunk)] = acc.astype(o_ref.dtype)

    return kernel


# ----------------------------------------------------------------------------
# wrapper: ComplexConv2d(k=3, stride=2, pad=1) + complex_relu
# ----------------------------------------------------------------------------
def complex_down_conv(xr, xi, wr, wi, br, bi, *, apply_relu=True,
                      max_tile=2048, chunk=256,
                      compute_dtype=jnp.bfloat16, out_dtype=jnp.bfloat16):
    N, C, H, W = xr.shape
    Cout = wr.shape[0]
    assert wr.shape == (Cout, C, 3, 3) and wi.shape == (Cout, C, 3, 3)

    # Pad spatial dims to even (the extra zero row/col is never read by valid
    # outputs; it only feeds sliced-off garbage positions).
    He, We = H + (H % 2), W + (W % 2)
    OH, OW = He // 2, We // 2          # conv output size (stride 2, pad 1, k 3)
    Hh, Wh = OH + 1, OW + 1            # space-to-depth (parity-plane) size

    # ---- input prep (single bf16 pass): pad-by-1 + stride-2 space-to-depth ----
    # TODO(synk): evaluate replacing this XLA transpose (size-2 minor dims) with a
    # strided-slice parity split if profiling shows it lowering to a slow gather.
    xcat = jnp.concatenate([xr, xi], axis=1).astype(compute_dtype)   # (N, 2C, H, W)
    xcat = jnp.pad(xcat, ((0, 0), (0, 0), (1, 1 + He - H), (1, 1 + We - W)))
    x6 = xcat.reshape(N, 2 * C, Hh, 2, Wh, 2)
    xs = x6.transpose(0, 3, 5, 1, 2, 4).reshape(N, 4, 2 * C, Hh * Wh)

    # ---- tiling over the flattened (row-major over (OH, Wh)) output axis ------
    max_tile = max(128, (max_tile // 128) * 128)
    chunk = max(128, (chunk // 128) * 128)
    m_full = OH * Wh
    tile_mf = min(_round_up(m_full, 128), max_tile)        # multiple of 128
    n_tiles = _cdiv(m_full, tile_mf)
    chunk = min(chunk, tile_mf)
    while tile_mf % chunk:                                  # chunk | tile_mf
        chunk -= 128
    n_chunks = tile_mf // chunk
    win = _round_up(tile_mf + Wh + 2, 128)                  # tile + tap halo
    L = (n_tiles - 1) * tile_mf + win
    xs = jnp.pad(xs, ((0, 0), (0, 0), (0, 0), (0, L - Hh * Wh)))

    # ---- per-tap stacked complex weights: [re|im]_out = W_tap @ [xr|xi]_in ----
    top = jnp.concatenate([wr, -wi], axis=1)     # rows -> real outputs
    bot = jnp.concatenate([wi, wr], axis=1)      # rows -> imag outputs
    wall = jnp.concatenate([top, bot], axis=0)   # (2Cout, 2C, 3, 3)
    coutp = max(_round_up(2 * Cout, 8), 8)
    w9 = wall.transpose(2, 3, 0, 1).reshape(9, 2 * Cout, 2 * C)
    w9 = jnp.pad(w9, ((0, 0), (0, coutp - 2 * Cout), (0, 0))).astype(compute_dtype)

    # complexPyTorch bias: real += (br - bi), imag += (br + bi)
    bvec = jnp.concatenate([br - bi, br + bi])
    bvec = jnp.pad(bvec, (0, coutp - 2 * Cout)).reshape(coutp, 1).astype(jnp.float32)

    # 9 kernel taps -> (parity plane, static lane offset) in the flattened plane
    tap_offsets = []
    for ki in range(3):
        di, p = divmod(ki, 2)
        for kj in range(3):
            dj, q = divmod(kj, 2)
            tap_offsets.append((2 * p + q, di * Wh + dj))

    kernel = _make_down_kernel(tuple(tap_offsets), tile_mf, win, chunk,
                               n_chunks, apply_relu)

    out = pl.pallas_call(
        kernel,
        grid_spec=pltpu.PrefetchScalarGridSpec(
            num_scalar_prefetch=0,
            grid=(N, n_tiles),
            in_specs=[
                pl.BlockSpec(memory_space=pl.ANY),                    # stays in HBM
                pl.BlockSpec((9, coutp, 2 * C), lambda n, t: (0, 0, 0)),
                pl.BlockSpec((coutp, 1), lambda n, t: (0, 0)),
            ],
            out_specs=pl.BlockSpec((1, coutp, tile_mf), lambda n, t: (n, 0, t)),
            scratch_shapes=[
                pltpu.VMEM((2, 4, 2 * C, win), compute_dtype),
                pltpu.SemaphoreType.DMA((2,)),
            ],
        ),
        out_shape=jax.ShapeDtypeStruct((N, coutp, n_tiles * tile_mf), out_dtype),
        compiler_params=pltpu.CompilerParams(
            dimension_semantics=("parallel", "arbitrary"),
            vmem_limit_bytes=32 * 1024 * 1024),
    )(xs, w9, bvec)

    # Channel-major result is already NCHW; drop padding / garbage column.
    out = out[:, :2 * Cout, :m_full].reshape(N, 2 * Cout, OH, Wh)[..., :OW]
    out = out.astype(jnp.float32)
    return out[:, :Cout], out[:, Cout:]


@jax.jit
def down4_forward(params, xr, xi):
    """Down4.forward: complex_relu(ComplexConv2d(Cin, Cout, 3, stride=2, pad=1)(x))."""
    wr, wi, br, bi = params
    out_r, out_i = complex_down_conv(xr, xi, wr, wi, br, bi, apply_relu=True)
    return lax.complex(out_r, out_i)


# ----------------------------------------------------------------------------
# plain-JAX reference (same bf16 MXU precision) for the self-check
# ----------------------------------------------------------------------------
def _reference(params, xr, xi, compute_dtype=jnp.bfloat16):
    wr, wi, br, bi = params

    def conv(x, w):
        return lax.conv_general_dilated(
            x.astype(compute_dtype), w.astype(compute_dtype),
            window_strides=(2, 2), padding=((1, 1), (1, 1)),
            dimension_numbers=("NCHW", "OIHW", "NCHW"),
            preferred_element_type=jnp.float32)

    re = conv(xr, wr) - conv(xi, wi) + (br - bi)[None, :, None, None]
    im = conv(xr, wi) + conv(xi, wr) + (br + bi)[None, :, None, None]
    return jnp.maximum(re, 0.0), jnp.maximum(im, 0.0)


# ----------------------------------------------------------------------------
if __name__ == "__main__":
    key = jax.random.PRNGKey(0)
    kx1, kx2, kw1, kw2, kb1, kb2 = jax.random.split(key, 6)

    # Down4 in CCNN-CGH uses (in=8, out=16); small spatial size for the demo.
    N, Cin, Cout, H, W = 2, 8, 16, 16, 16
    xr = jax.random.normal(kx1, (N, Cin, H, W), jnp.float32)
    xi = jax.random.normal(kx2, (N, Cin, H, W), jnp.float32)
    wr = 0.1 * jax.random.normal(kw1, (Cout, Cin, 3, 3), jnp.float32)
    wi = 0.1 * jax.random.normal(kw2, (Cout, Cin, 3, 3), jnp.float32)
    br = 0.01 * jax.random.normal(kb1, (Cout,), jnp.float32)
    bi = 0.01 * jax.random.normal(kb2, (Cout,), jnp.float32)
    params = (wr, wi, br, bi)

    out = down4_forward(params, xr, xi)
    out = jax.block_until_ready(out)

    assert out.shape == (N, Cout, H // 2, W // 2), out.shape
    assert out.dtype == jnp.complex64, out.dtype

    ref_r, ref_i = _reference(params, xr, xi)
    assert bool(jnp.all(jnp.isfinite(out.real)) & jnp.all(jnp.isfinite(out.imag)))
    assert bool(jnp.allclose(out.real, ref_r, atol=5e-2, rtol=5e-2)), "real mismatch"
    assert bool(jnp.allclose(out.imag, ref_i, atol=5e-2, rtol=5e-2)), "imag mismatch"

    # Second case: odd spatial size + tiny max_tile so the multi-tile manual
    # DMA path (halo windows, cross-tile prefetch, n_tiles > 1) is exercised.
    N2, Cin2, Cout2, H2, W2 = 1, 4, 8, 37, 37
    k1, k2, k3, k4, k5, k6 = jax.random.split(jax.random.PRNGKey(1), 6)
    xr2 = jax.random.normal(k1, (N2, Cin2, H2, W2), jnp.float32)
    xi2 = jax.random.normal(k2, (N2, Cin2, H2, W2), jnp.float32)
    wr2 = 0.1 * jax.random.normal(k3, (Cout2, Cin2, 3, 3), jnp.float32)
    wi2 = 0.1 * jax.random.normal(k4, (Cout2, Cin2, 3, 3), jnp.float32)
    br2 = 0.01 * jax.random.normal(k5, (Cout2,), jnp.float32)
    bi2 = 0.01 * jax.random.normal(k6, (Cout2,), jnp.float32)
    params2 = (wr2, wi2, br2, bi2)

    f2 = jax.jit(functools.partial(complex_down_conv, apply_relu=True,
                                   max_tile=128))
    r2, i2 = f2(xr2, xi2, wr2, wi2, br2, bi2)
    r2, i2 = jax.block_until_ready((r2, i2))
    ref_r2, ref_i2 = _reference(params2, xr2, xi2)
    assert r2.shape == (N2, Cout2, (H2 + 1) // 2, (W2 + 1) // 2), r2.shape
    assert bool(jnp.allclose(r2, ref_r2, atol=5e-2, rtol=5e-2)), "real mismatch (tiled)"
    assert bool(jnp.allclose(i2, ref_i2, atol=5e-2, rtol=5e-2)), "imag mismatch (tiled)"

    print("KERNEL_OK")
</pallas_src>

<mosaic_0001>
module attributes {stable_mosaic.version = 11 : i64} {
  func.func @kernel(%arg0: i32, %arg1: i32, %arg2: memref<2x4x16x256xbf16, #tpu.memory_space<any>>, %arg3: memref<9x32x16xbf16, #tpu.memory_space<vmem>>, %arg4: memref<32x1xf32, #tpu.memory_space<vmem>>, %arg5: memref<1x32x128xbf16, #tpu.memory_space<vmem>>, %arg6: memref<2x4x16x256xbf16, #tpu.memory_space<vmem>>, %arg7: memref<2x!tpu.dma_semaphore, #tpu.memory_space<semaphore_mem>>) attributes {dimension_semantics = [#tpu.dimension_semantics<parallel>, #tpu.dimension_semantics<arbitrary>], iteration_bounds = array<i64: 2, 1>, scalar_prefetch = 0 : i64, scratch_operands = 2 : i64, tpu.core_type = #tpu.core_type<tc>, window_params = [{}, {pipeline_mode = #tpu.pipeline_mode<synchronous>, transform_indices = @transform_1, window_bounds = array<i64: 9, 32, 16>}, {pipeline_mode = #tpu.pipeline_mode<synchronous>, transform_indices = @transform_2, window_bounds = array<i64: 32, 1>}, {transform_indices = @transform_3, window_bounds = array<i64: 1, 32, 128>}]} {
    %c2_i32 = arith.constant 2 : i32
    %c0_i32 = arith.constant 0 : i32
    %0 = arith.cmpi eq, %c2_i32, %c0_i32 : i32
    %c1_i32 = arith.constant 1 : i32
    %1 = arith.select %0, %c1_i32, %c2_i32 : i32
    %2 = arith.remsi %arg1, %1 : i32
    %c0_i32_0 = arith.constant 0 : i32
    %3 = arith.cmpi ne, %2, %c0_i32_0 : i32
    %c0_i32_1 = arith.constant 0 : i32
    %4 = arith.cmpi slt, %2, %c0_i32_1 : i32
    %c0_i32_2 = arith.constant 0 : i32
    %5 = arith.cmpi slt, %1, %c0_i32_2 : i32
    %6 = arith.xori %4, %5 : i1
    %7 = arith.andi %6, %3 : i1
    %8 = arith.addi %2, %1 : i32
    %9 = arith.select %7, %8, %2 : i32
    %c0_i32_3 = arith.constant 0 : i32
    %10 = arith.cmpi eq, %arg1, %c0_i32_3 : i32
    %11 = arith.extui %10 : i1 to i32
    %c0_i32_4 = arith.constant 0 : i32
    %12 = arith.cmpi ne, %11, %c0_i32_4 : i32
    scf.if %12 {
      %c128_i32_70 = arith.constant 128 : i32
      %95 = arith.muli %arg1, %c128_i32_70 : i32
      %c0_i32_71 = arith.constant 0 : i32
      %c0_i32_72 = arith.constant 0 : i32
      %96 = tpu.memref_slice %arg2[%arg0, %c0_i32_71, %c0_i32_72, %95] : memref<2x4x16x256xbf16, #tpu.memory_space<any>> -> memref<1x4x16x256xbf16, #tpu.memory_space<any>>
      %97 = tpu.memref_squeeze %96 : memref<1x4x16x256xbf16, #tpu.memory_space<any>> -> memref<4x16x256xbf16, #tpu.memory_space<any>>
      %c0_i32_73 = arith.constant 0 : i32
      %c0_i32_74 = arith.constant 0 : i32
      %c0_i32_75 = arith.constant 0 : i32
      %98 = tpu.memref_slice %arg6[%9, %c0_i32_73, %c0_i32_74, %c0_i32_75] : memref<2x4x16x256xbf16, #tpu.memory_space<vmem>> -> memref<1x4x16x256xbf16, #tpu.memory_space<vmem>>
      %99 = tpu.memref_squeeze %98 : memref<1x4x16x256xbf16, #tpu.memory_space<vmem>> -> memref<4x16x256xbf16, #tpu.memory_space<vmem>>
      %100 = tpu.memref_slice %arg7[%9] : memref<2x!tpu.dma_semaphore, #tpu.memory_space<semaphore_mem>> -> memref<1x!tpu.dma_semaphore, #tpu.memory_space<semaphore_mem>>
      %101 = tpu.memref_squeeze %100 : memref<1x!tpu.dma_semaphore, #tpu.memory_space<semaphore_mem>> -> memref<!tpu.dma_semaphore, #tpu.memory_space<semaphore_mem>>
      tpu.enqueue_dma source(%97 : memref<4x16x256xbf16, #tpu.memory_space<any>>) target(%99 : memref<4x16x256xbf16, #tpu.memory_space<vmem>>) target_semaphore(%101 : memref<!tpu.dma_semaphore, #tpu.memory_space<semaphore_mem>>)
    } else {
    }
    %c128_i32 = arith.constant 128 : i32
    %13 = arith.muli %arg1, %c128_i32 : i32
    %c0_i32_5 = arith.constant 0 : i32
    %c0_i32_6 = arith.constant 0 : i32
    %14 = tpu.memref_slice %arg2[%arg0, %c0_i32_5, %c0_i32_6, %13] : memref<2x4x16x256xbf16, #tpu.memory_space<any>> -> memref<1x4x16x256xbf16, #tpu.memory_space<any>>
    %15 = tpu.memref_squeeze %14 : memref<1x4x16x256xbf16, #tpu.memory_space<any>> -> memref<4x16x256xbf16, #tpu.memory_space<any>>
    %c0_i32_7 = arith.constant 0 : i32
    %c0_i32_8 = arith.constant 0 : i32
    %c0_i32_9 = arith.constant 0 : i32
    %16 = tpu.memref_slice %arg6[%9, %c0_i32_7, %c0_i32_8, %c0_i32_9] : memref<2x4x16x256xbf16, #tpu.memory_space<vmem>> -> memref<1x4x16x256xbf16, #tpu.memory_space<vmem>>
    %17 = tpu.memref_squeeze %16 : memref<1x4x16x256xbf16, #tpu.memory_space<vmem>> -> memref<4x16x256xbf16, #tpu.memory_space<vmem>>
    %18 = tpu.memref_slice %arg7[%9] : memref<2x!tpu.dma_semaphore, #tpu.memory_space<semaphore_mem>> -> memref<1x!tpu.dma_semaphore, #tpu.memory_space<semaphore_mem>>
    %19 = tpu.memref_squeeze %18 : memref<1x!tpu.dma_semaphore, #tpu.memory_space<semaphore_mem>> -> memref<!tpu.dma_semaphore, #tpu.memory_space<semaphore_mem>>
    tpu.wait_dma2 semaphore(%19 : memref<!tpu.dma_semaphore, #tpu.memory_space<semaphore_mem>>) src(%15 : memref<4x16x256xbf16, #tpu.memory_space<any>>) dst(%17 : memref<4x16x256xbf16, #tpu.memory_space<vmem>>)
    %c1_i32_10 = arith.constant 1 : i32
    %20 = arith.addi %arg1, %c1_i32_10 : i32
    %c1_i32_11 = arith.constant 1 : i32
    %21 = arith.cmpi slt, %20, %c1_i32_11 : i32
    %22 = arith.extui %21 : i1 to i32
    %c0_i32_12 = arith.constant 0 : i32
    %23 = arith.cmpi ne, %22, %c0_i32_12 : i32
    scf.if %23 {
      %c1_i32_70 = arith.constant 1 : i32
      %95 = arith.addi %arg1, %c1_i32_70 : i32
      %c1_i32_71 = arith.constant 1 : i32
      %96 = arith.subi %c1_i32_71, %9 : i32
      %c128_i32_72 = arith.constant 128 : i32
      %97 = arith.muli %95, %c128_i32_72 : i32
      %c0_i32_73 = arith.constant 0 : i32
      %c0_i32_74 = arith.constant 0 : i32
      %98 = tpu.memref_slice %arg2[%arg0, %c0_i32_73, %c0_i32_74, %97] : memref<2x4x16x256xbf16, #tpu.memory_space<any>> -> memref<1x4x16x256xbf16, #tpu.memory_space<any>>
      %99 = tpu.memref_squeeze %98 : memref<1x4x16x256xbf16, #tpu.memory_space<any>> -> memref<4x16x256xbf16, #tpu.memory_space<any>>
      %c0_i32_75 = arith.constant 0 : i32
      %c0_i32_76 = arith.constant 0 : i32
      %c0_i32_77 = arith.constant 0 : i32
      %100 = tpu.memref_slice %arg6[%96, %c0_i32_75, %c0_i32_76, %c0_i32_77] : memref<2x4x16x256xbf16, #tpu.memory_space<vmem>> -> memref<1x4x16x256xbf16, #tpu.memory_space<vmem>>
      %101 = tpu.memref_squeeze %100 : memref<1x4x16x256xbf16, #tpu.memory_space<vmem>> -> memref<4x16x256xbf16, #tpu.memory_space<vmem>>
      %102 = tpu.memref_slice %arg7[%96] : memref<2x!tpu.dma_semaphore, #tpu.memory_space<semaphore_mem>> -> memref<1x!tpu.dma_semaphore, #tpu.memory_space<semaphore_mem>>
      %103 = tpu.memref_squeeze %102 : memref<1x!tpu.dma_semaphore, #tpu.memory_space<semaphore_mem>> -> memref<!tpu.dma_semaphore, #tpu.memory_space<semaphore_mem>>
      tpu.enqueue_dma source(%99 : memref<4x16x256xbf16, #tpu.memory_space<any>>) target(%101 : memref<4x16x256xbf16, #tpu.memory_space<vmem>>) target_semaphore(%103 : memref<!tpu.dma_semaphore, #tpu.memory_space<semaphore_mem>>)
    } else {
    }
    %c0 = arith.constant 0 : index
    %c0_13 = arith.constant 0 : index
    %24 = vector.load %arg4[%c0, %c0_13] : memref<32x1xf32, #tpu.memory_space<vmem>>, vector<32x1xf32>
    %25 = arith.index_cast %9 : i32 to index
    %c0_14 = arith.constant 0 : index
    %c0_15 = arith.constant 0 : index
    %c0_16 = arith.constant 0 : index
    %26 = vector.load %arg6[%25, %c0_14, %c0_15, %c0_16] : memref<2x4x16x256xbf16, #tpu.memory_space<vmem>>, vector<1x1x16x128xbf16>
    %27 = vector.shape_cast %26 : vector<1x1x16x128xbf16> to vector<16x128xbf16>
    %c0_17 = arith.constant 0 : index
    %c0_18 = arith.constant 0 : index
    %c0_19 = arith.constant 0 : index
    %28 = vector.load %arg3[%c0_17, %c0_18, %c0_19] : memref<9x32x16xbf16, #tpu.memory_space<vmem>>, vector<1x32x16xbf16>
    %29 = vector.shape_cast %28 : vector<1x32x16xbf16> to vector<32x16xbf16>
    %cst = arith.constant dense<0.000000e+00> : vector<32x128xf32>
    %30 = tpu.matmul %29, %27, %cst {dimension_numbers = #tpu.dot_dimension_numbers<[1], [0], [0], [1], [0, 0, 1, 1], [], []>} : vector<32x16xbf16>, vector<16x128xbf16>, vector<32x128xf32> -> vector<32x128xf32>
    %31 = arith.index_cast %9 : i32 to index
    %c1 = arith.constant 1 : index
    %c0_20 = arith.constant 0 : index
    %c0_21 = arith.constant 0 : index
    %32 = vector.load %arg6[%31, %c1, %c0_20, %c0_21] : memref<2x4x16x256xbf16, #tpu.memory_space<vmem>>, vector<1x1x16x128xbf16>
    %33 = vector.shape_cast %32 : vector<1x1x16x128xbf16> to vector<16x128xbf16>
    %c1_22 = arith.constant 1 : index
    %c0_23 = arith.constant 0 : index
    %c0_24 = arith.constant 0 : index
    %34 = vector.load %arg3[%c1_22, %c0_23, %c0_24] : memref<9x32x16xbf16, #tpu.memory_space<vmem>>, vector<1x32x16xbf16>
    %35 = vector.shape_cast %34 : vector<1x32x16xbf16> to vector<32x16xbf16>
    %cst_25 = arith.constant dense<0.000000e+00> : vector<32x128xf32>
    %36 = tpu.matmul %35, %33, %cst_25 {dimension_numbers = #tpu.dot_dimension_numbers<[1], [0], [0], [1], [0, 0, 1, 1], [], []>} : vector<32x16xbf16>, vector<16x128xbf16>, vector<32x128xf32> -> vector<32x128xf32>
    %37 = arith.addf %30, %36 : vector<32x128xf32>
    %38 = arith.index_cast %9 : i32 to index
    %c0_26 = arith.constant 0 : index
    %c0_27 = arith.constant 0 : index
    %c1_28 = arith.constant 1 : index
    %39 = vector.load %arg6[%38, %c0_26, %c0_27, %c1_28] : memref<2x4x16x256xbf16, #tpu.memory_space<vmem>>, vector<1x1x16x128xbf16>
    %40 = vector.shape_cast %39 : vector<1x1x16x128xbf16> to vector<16x128xbf16>
    %c2 = arith.constant 2 : index
    %c0_29 = arith.constant 0 : index
    %c0_30 = arith.constant 0 : index
    %41 = vector.load %arg3[%c2, %c0_29, %c0_30] : memref<9x32x16xbf16, #tpu.memory_space<vmem>>, vector<1x32x16xbf16>
    %42 = vector.shape_cast %41 : vector<1x32x16xbf16> to vector<32x16xbf16>
    %cst_31 = arith.constant dense<0.000000e+00> : vector<32x128xf32>
    %43 = tpu.matmul %42, %40, %cst_31 {dimension_numbers = #tpu.dot_dimension_numbers<[1], [0], [0], [1], [0, 0, 1, 1], [], []>} : vector<32x16xbf16>, vector<16x128xbf16>, vector<32x128xf32> -> vector<32x128xf32>
    %44 = arith.addf %37, %43 : vector<32x128xf32>
    %45 = arith.index_cast %9 : i32 to index
    %c2_32 = arith.constant 2 : index
    %c0_33 = arith.constant 0 : index
    %c0_34 = arith.constant 0 : index
    %46 = vector.load %arg6[%45, %c2_32, %c0_33, %c0_34] : memref<2x4x16x256xbf16, #tpu.memory_space<vmem>>, vector<1x1x16x128xbf16>
    %47 = vector.shape_cast %46 : vector<1x1x16x128xbf16> to vector<16x128xbf16>
    %c3 = arith.constant 3 : index
    %c0_35 = arith.constant 0 : index
    %c0_36 = arith.constant 0 : index
    %48 = vector.load %arg3[%c3, %c0_35, %c0_36] : memref<9x32x16xbf16, #tpu.memory_space<vmem>>, vector<1x32x16xbf16>
    %49 = vector.shape_cast %48 : vector<1x32x16xbf16> to vector<32x16xbf16>
    %cst_37 = arith.constant dense<0.000000e+00> : vector<32x128xf32>
    %50 = tpu.matmul %49, %47, %cst_37 {dimension_numbers = #tpu.dot_dimension_numbers<[1], [0], [0], [1], [0, 0, 1, 1], [], []>} : vector<32x16xbf16>, vector<16x128xbf16>, vector<32x128xf32> -> vector<32x128xf32>
    %51 = arith.addf %44, %50 : vector<32x128xf32>
    %52 = arith.index_cast %9 : i32 to index
    %c3_38 = arith.constant 3 : index
    %c0_39 = arith.constant 0 : index
    %c0_40 = arith.constant 0 : index
    %53 = vector.load %arg6[%52, %c3_38, %c0_39, %c0_40] : memref<2x4x16x256xbf16, #tpu.memory_space<vmem>>, vector<1x1x16x128xbf16>
    %54 = vector.shape_cast %53 : vector<1x1x16x128xbf16> to vector<16x128xbf16>
    %c4 = arith.constant 4 : index
    %c0_41 = arith.constant 0 : index
    %c0_42 = arith.constant 0 : index
    %55 = vector.load %arg3[%c4, %c0_41, %c0_42] : memref<9x32x16xbf16, #tpu.memory_space<vmem>>, vector<1x32x16xbf16>
    %56 = vector.shape_cast %55 : vector<1x32x16xbf16> to vector<32x16xbf16>
    %cst_43 = arith.constant dense<0.000000e+00> : vector<32x128xf32>
    %57 = tpu.matmul %56, %54, %cst_43 {dimension_numbers = #tpu.dot_dimension_numbers<[1], [0], [0], [1], [0, 0, 1, 1], [], []>} : vector<32x16xbf16>, vector<16x128xbf16>, vector<32x128xf32> -> vector<32x128xf32>
    %58 = arith.addf %51, %57 : vector<32x128xf32>
    %59 = arith.index_cast %9 : i32 to index
    %c2_44 = arith.constant 2 : index
    %c0_45 = arith.constant 0 : index
    %c1_46 = arith.constant 1 : index
    %60 = vector.load %arg6[%59, %c2_44, %c0_45, %c1_46] : memref<2x4x16x256xbf16, #tpu.memory_space<vmem>>, vector<1x1x16x128xbf16>
    %61 = vector.shape_cast %60 : vector<1x1x16x128xbf16> to vector<16x128xbf16>
    %c5 = arith.constant 5 : index
    %c0_47 = arith.constant 0 : index
    %c0_48 = arith.constant 0 : index
    %62 = vector.load %arg3[%c5, %c0_47, %c0_48] : memref<9x32x16xbf16, #tpu.memory_space<vmem>>, vector<1x32x16xbf16>
    %63 = vector.shape_cast %62 : vector<1x32x16xbf16> to vector<32x16xbf16>
    %cst_49 = arith.constant dense<0.000000e+00> : vector<32x128xf32>
    %64 = tpu.matmul %63, %61, %cst_49 {dimension_numbers = #tpu.dot_dimension_numbers<[1], [0], [0], [1], [0, 0, 1, 1], [], []>} : vector<32x16xbf16>, vector<16x128xbf16>, vector<32x128xf32> -> vector<32x128xf32>
    %65 = arith.addf %58, %64 : vector<32x128xf32>
    %66 = arith.index_cast %9 : i32 to index
    %c0_50 = arith.constant 0 : index
    %c0_51 = arith.constant 0 : index
    %c9 = arith.constant 9 : index
    %67 = vector.load %arg6[%66, %c0_50, %c0_51, %c9] : memref<2x4x16x256xbf16, #tpu.memory_space<vmem>>, vector<1x1x16x128xbf16>
    %68 = vector.shape_cast %67 : vector<1x1x16x128xbf16> to vector<16x128xbf16>
    %c6 = arith.constant 6 : index
    %c0_52 = arith.constant 0 : index
    %c0_53 = arith.constant 0 : index
    %69 = vector.load %arg3[%c6, %c0_52, %c0_53] : memref<9x32x16xbf16, #tpu.memory_space<vmem>>, vector<1x32x16xbf16>
    %70 = vector.shape_cast %69 : vector<1x32x16xbf16> to vector<32x16xbf16>
    %cst_54 = arith.constant dense<0.000000e+00> : vector<32x128xf32>
    %71 = tpu.matmul %70, %68, %cst_54 {dimension_numbers = #tpu.dot_dimension_numbers<[1], [0], [0], [1], [0, 0, 1, 1], [], []>} : vector<32x16xbf16>, vector<16x128xbf16>, vector<32x128xf32> -> vector<32x128xf32>
    %72 = arith.addf %65, %71 : vector<32x128xf32>
    %73 = arith.index_cast %9 : i32 to index
    %c1_55 = arith.constant 1 : index
    %c0_56 = arith.constant 0 : index
    %c9_57 = arith.constant 9 : index
    %74 = vector.load %arg6[%73, %c1_55, %c0_56, %c9_57] : memref<2x4x16x256xbf16, #tpu.memory_space<vmem>>, vector<1x1x16x128xbf16>
    %75 = vector.shape_cast %74 : vector<1x1x16x128xbf16> to vector<16x128xbf16>
    %c7 = arith.constant 7 : index
    %c0_58 = arith.constant 0 : index
    %c0_59 = arith.constant 0 : index
    %76 = vector.load %arg3[%c7, %c0_58, %c0_59] : memref<9x32x16xbf16, #tpu.memory_space<vmem>>, vector<1x32x16xbf16>
    %77 = vector.shape_cast %76 : vector<1x32x16xbf16> to vector<32x16xbf16>
    %cst_60 = arith.constant dense<0.000000e+00> : vector<32x128xf32>
    %78 = tpu.matmul %77, %75, %cst_60 {dimension_numbers = #tpu.dot_dimension_numbers<[1], [0], [0], [1], [0, 0, 1, 1], [], []>} : vector<32x16xbf16>, vector<16x128xbf16>, vector<32x128xf32> -> vector<32x128xf32>
    %79 = arith.addf %72, %78 : vector<32x128xf32>
    %80 = arith.index_cast %9 : i32 to index
    %c0_61 = arith.constant 0 : index
    %c0_62 = arith.constant 0 : index
    %c10 = arith.constant 10 : index
    %81 = vector.load %arg6[%80, %c0_61, %c0_62, %c10] : memref<2x4x16x256xbf16, #tpu.memory_space<vmem>>, vector<1x1x16x128xbf16>
    %82 = vector.shape_cast %81 : vector<1x1x16x128xbf16> to vector<16x128xbf16>
    %c8 = arith.constant 8 : index
    %c0_63 = arith.constant 0 : index
    %c0_64 = arith.constant 0 : index
    %83 = vector.load %arg3[%c8, %c0_63, %c0_64] : memref<9x32x16xbf16, #tpu.memory_space<vmem>>, vector<1x32x16xbf16>
    %84 = vector.shape_cast %83 : vector<1x32x16xbf16> to vector<32x16xbf16>
    %cst_65 = arith.constant dense<0.000000e+00> : vector<32x128xf32>
    %85 = tpu.matmul %84, %82, %cst_65 {dimension_numbers = #tpu.dot_dimension_numbers<[1], [0], [0], [1], [0, 0, 1, 1], [], []>} : vector<32x16xbf16>, vector<16x128xbf16>, vector<32x128xf32> -> vector<32x128xf32>
    %86 = arith.addf %79, %85 : vector<32x128xf32>
    %87 = vector.broadcast %24 : vector<32x1xf32> to vector<32x128xf32>
    %88 = arith.addf %86, %87 : vector<32x128xf32>
    %cst_66 = arith.constant 0.000000e+00 : f32
    %89 = vector.broadcast %cst_66 : f32 to vector<32x128xf32>
    %90 = arith.maximumf %88, %89 : vector<32x128xf32>
    %91 = arith.truncf %90 : vector<32x128xf32> to vector<32x128xbf16>
    %c0_67 = arith.constant 0 : index
    %c0_68 = arith.constant 0 : index
    %c0_69 = arith.constant 0 : index
    %92 = vector.load %arg5[%c0_67, %c0_68, %c0_69] : memref<1x32x128xbf16, #tpu.memory_space<vmem>>, vector<1x32x128xbf16>
    %93 = vector.shape_cast %92 : vector<1x32x128xbf16> to vector<32x128xbf16>
    %94 = vector.shape_cast %91 : vector<32x128xbf16> to vector<1x32x128xbf16>
    tpu.vector_store %arg5[%c0_67, %c0_68, %c0_69], %94 {strides = array<i32>} : memref<1x32x128xbf16, #tpu.memory_space<vmem>>, vector<1x32x128xbf16>,
    return
  }
  func.func @transform_1(%arg0: i32, %arg1: i32) -> (i32, i32, i32) {
    %c0_i32 = arith.constant 0 : i32
    %c0_i32_0 = arith.constant 0 : i32
    %c0_i32_1 = arith.constant 0 : i32
    %c0_i32_2 = arith.constant 0 : i32
    return %c0_i32, %c0_i32_0, %c0_i32_1 : i32, i32, i32
  }
  func.func @transform_2(%arg0: i32, %arg1: i32) -> (i32, i32) {
    %c0_i32 = arith.constant 0 : i32
    %c0_i32_0 = arith.constant 0 : i32
    %c0_i32_1 = arith.constant 0 : i32
    return %c0_i32, %c0_i32_0 : i32, i32
  }
  func.func @transform_3(%arg0: i32, %arg1: i32) -> (i32, i32, i32) {
    %c0_i32 = arith.constant 0 : i32
    %c0_i32_0 = arith.constant 0 : i32
    return %arg0, %c0_i32, %arg1 : i32, i32, i32
  }
}

</mosaic_0001>

<llo_original>
// kernel: custom-call
$region0: #{custom-call}
  %s0 = inlined_call_operand.vmem [shape: f32[2,16,8,8], index: 0, kind: input, shape index: {}]
  %s1 = inlined_call_operand.vmem [shape: f32[2,16,8,8], index: 1, kind: input, shape index: {}]
  %s2 = inlined_call_operand.vmem [shape: c64[2,16,8,8], index: 2, kind: output, shape index: {}]
  %s4 = scalar_lea.vmem %s2, 128
  %v5 = vld [vmem:[%s0] sm:$0xff]
  %6 = vst [vmem:[%s2] sm:$0xff] %v5
  %s7 = scalar_lea.vmem %s2, 8
  %s8 = scalar_lea.vmem %s0, 8
  %v9 = vld [vmem:[%s8] sm:$0xff]
  %10 = vst [vmem:[%s7] sm:$0xff] %v9
  %s11 = scalar_lea.vmem %s2, 16
  %s12 = scalar_lea.vmem %s0, 16
  %v13 = vld [vmem:[%s12] sm:$0xff]
  %14 = vst [vmem:[%s11] sm:$0xff] %v13
  %s15 = scalar_lea.vmem %s2, 24
  %s16 = scalar_lea.vmem %s0, 24
  %v17 = vld [vmem:[%s16] sm:$0xff]
  %18 = vst [vmem:[%s15] sm:$0xff] %v17
  %s19 = scalar_lea.vmem %s2, 32
  %s20 = scalar_lea.vmem %s0, 32
  %v21 = vld [vmem:[%s20] sm:$0xff]
  %22 = vst [vmem:[%s19] sm:$0xff] %v21
  %s23 = scalar_lea.vmem %s2, 40
  %s24 = scalar_lea.vmem %s0, 40
  %v25 = vld [vmem:[%s24] sm:$0xff]
  %26 = vst [vmem:[%s23] sm:$0xff] %v25
  %s27 = scalar_lea.vmem %s2, 48
  %s28 = scalar_lea.vmem %s0, 48
  %v29 = vld [vmem:[%s28] sm:$0xff]
  %30 = vst [vmem:[%s27] sm:$0xff] %v29
  %s31 = scalar_lea.vmem %s2, 56
  %s32 = scalar_lea.vmem %s0, 56
  %v33 = vld [vmem:[%s32] sm:$0xff]
  %34 = vst [vmem:[%s31] sm:$0xff] %v33
  %s35 = scalar_lea.vmem %s2, 64
  %s36 = scalar_lea.vmem %s0, 64
  %v37 = vld [vmem:[%s36] sm:$0xff]
  %38 = vst [vmem:[%s35] sm:$0xff] %v37
  %s39 = scalar_lea.vmem %s2, 72
  %s40 = scalar_lea.vmem %s0, 72
  %v41 = vld [vmem:[%s40] sm:$0xff]
  %42 = vst [vmem:[%s39] sm:$0xff] %v41
  %s43 = scalar_lea.vmem %s2, 80
  %s44 = scalar_lea.vmem %s0, 80
  %v45 = vld [vmem:[%s44] sm:$0xff]
  %46 = vst [vmem:[%s43] sm:$0xff] %v45
  %s47 = scalar_lea.vmem %s2, 88
  %s48 = scalar_lea.vmem %s0, 88
  %v49 = vld [vmem:[%s48] sm:$0xff]
  %50 = vst [vmem:[%s47] sm:$0xff] %v49
  %s51 = scalar_lea.vmem %s2, 96
  %s52 = scalar_lea.vmem %s0, 96
  %v53 = vld [vmem:[%s52] sm:$0xff]
  %54 = vst [vmem:[%s51] sm:$0xff] %v53
  %s55 = scalar_lea.vmem %s2, 104
  %s56 = scalar_lea.vmem %s0, 104
  %v57 = vld [vmem:[%s56] sm:$0xff]
  %58 = vst [vmem:[%s55] sm:$0xff] %v57
  %s59 = scalar_lea.vmem %s2, 112
  %s60 = scalar_lea.vmem %s0, 112
  %v61 = vld [vmem:[%s60] sm:$0xff]
  %62 = vst [vmem:[%s59] sm:$0xff] %v61
  %s63 = scalar_lea.vmem %s2, 120
  %s64 = scalar_lea.vmem %s0, 120
  %v65 = vld [vmem:[%s64] sm:$0xff]
  %66 = vst [vmem:[%s63] sm:$0xff] %v65
  %v67 = vld [vmem:[%s1] sm:$0xff]
  %68 = vst [vmem:[%s4] sm:$0xff] %v67
  %s69 = scalar_lea.vmem %s4, 8
  %s70 = scalar_lea.vmem %s1, 8
  %v71 = vld [vmem:[%s70] sm:$0xff]
  %72 = vst [vmem:[%s69] sm:$0xff] %v71
  %s73 = scalar_lea.vmem %s4, 16
  %s74 = scalar_lea.vmem %s1, 16
  %v75 = vld [vmem:[%s74] sm:$0xff]
  %76 = vst [vmem:[%s73] sm:$0xff] %v75
  %s77 = scalar_lea.vmem %s4, 24
  %s78 = scalar_lea.vmem %s1, 24
  %v79 = vld [vmem:[%s78] sm:$0xff]
  %80 = vst [vmem:[%s77] sm:$0xff] %v79
  %s81 = scalar_lea.vmem %s4, 32
  %s82 = scalar_lea.vmem %s1, 32
  %v83 = vld [vmem:[%s82] sm:$0xff]
  %84 = vst [vmem:[%s81] sm:$0xff] %v83
  %s85 = scalar_lea.vmem %s4, 40
  %s86 = scalar_lea.vmem %s1, 40
  %v87 = vld [vmem:[%s86] sm:$0xff]
  %88 = vst [vmem:[%s85] sm:$0xff] %v87
  %s89 = scalar_lea.vmem %s4, 48
  %s90 = scalar_lea.vmem %s1, 48
  %v91 = vld [vmem:[%s90] sm:$0xff]
  %92 = vst [vmem:[%s89] sm:$0xff] %v91
  %s93 = scalar_lea.vmem %s4, 56
  %s94 = scalar_lea.vmem %s1, 56
  %v95 = vld [vmem:[%s94] sm:$0xff]
  %96 = vst [vmem:[%s93] sm:$0xff] %v95
  %s97 = scalar_lea.vmem %s4, 64
  %s98 = scalar_lea.vmem %s1, 64
  %v99 = vld [vmem:[%s98] sm:$0xff]
  %100 = vst [vmem:[%s97] sm:$0xff] %v99
  %s101 = scalar_lea.vmem %s4, 72
  %s102 = scalar_lea.vmem %s1, 72
  %v103 = vld [vmem:[%s102] sm:$0xff]
  %104 = vst [vmem:[%s101] sm:$0xff] %v103
  %s105 = scalar_lea.vmem %s4, 80
  %s106 = scalar_lea.vmem %s1, 80
  %v107 = vld [vmem:[%s106] sm:$0xff]
  %108 = vst [vmem:[%s105] sm:$0xff] %v107
  %s109 = scalar_lea.vmem %s4, 88
  %s110 = scalar_lea.vmem %s1, 88
  %v111 = vld [vmem:[%s110] sm:$0xff]
  %112 = vst [vmem:[%s109] sm:$0xff] %v111
  %s113 = scalar_lea.vmem %s4, 96
  %s114 = scalar_lea.vmem %s1, 96
  %v115 = vld [vmem:[%s114] sm:$0xff]
  %116 = vst [vmem:[%s113] sm:$0xff] %v115
  %s117 = scalar_lea.vmem %s4, 104
  %s118 = scalar_lea.vmem %s1, 104
  %v119 = vld [vmem:[%s118] sm:$0xff]
  %120 = vst [vmem:[%s117] sm:$0xff] %v119
  %s121 = scalar_lea.vmem %s4, 112
  %s122 = scalar_lea.vmem %s1, 112
  %v123 = vld [vmem:[%s122] sm:$0xff]
  %124 = vst [vmem:[%s121] sm:$0xff] %v123
  %s125 = scalar_lea.vmem %s4, 120
  %s126 = scalar_lea.vmem %s1, 120
  %v127 = vld [vmem:[%s126] sm:$0xff]
  %128 = vst [vmem:[%s125] sm:$0xff] %v127

// kernel: down4_forward.1
$region0: #{down4_forward.1}
  #allocation0 [shape = 'u32[]', space=smem, size = 0x4, offset = 0x4, fixed_abs, tag = 'smem constant byte address 0x4 - core index']
  #allocation1 [shape = 'u32[144,128]{1,0:T(1,128)}', space=vmem, size = 0x12000, scoped, tag = 'internal scratch']
  #allocation2 [shape = 'bf16[2,4,16,256]{3,2,1,0:T(8,128)(2,1)}', space=vmem, size = 0x10000, scoped, tag = 'scratch operand']
  #allocation3 [shape = 's32[2]{0}', space=sflag, size = 0x8, scoped, tag = 'scratch operand']
  #allocation4 [shape = 's32[]', space=sflag, size = 0x4, offset = 0, fixed_abs, tag = 'sflag constant byte address 0x0 - dummy sync flag']
  #allocation5 [shape = 's32[]', space=sflag, size = 0x4, offset = 0, fixed_abs, tag = 'sflag constant byte address 0x0 - dummy sync flag']
  %s0 = inlined_call_operand.vmem [shape: bf16[2,4,16,256], index: 0, kind: input, shape index: {}]
  %s1 = inlined_call_operand.vmem [shape: bf16[9,32,16], index: 1, kind: input, shape index: {}]
  %s2 = inlined_call_operand.vmem [shape: f32[32,1], index: 2, kind: input, shape index: {}]
  %s3 = inlined_call_operand.vmem [shape: bf16[2,32,128], index: 3, kind: output, shape index: {}]
  %s4 = sld [smem:[#allocation0]]
  $region117: #{down4_forward.1} parent=0
    _
  %s6 = ssub.s32 1, %s4
  %s7 = scalar_select 0, %s6, %s4
  loop: start=0, step=1, limit=4
  $region2: #{down4_forward.1} parent=0 // loop_pre_header
    _
  $region3: #{down4_forward.1} parent=0 // loop_header
    %s9 = sphi 0, %s13
    %p10 = scmp.ge.s32.totalorder %s9, 4
    %s16 = sphi 0, %s28
    %s17 = sphi 0, %s24
    %s18 = sphi 0, %s16
    %s19 = sphi 0, %s17
    %s20 = sphi 0, %s18
    %s21 = sphi 0, %s19
    %s29 = sphi 0, %s29
    %s31 = sphi 0, %s29
    %s32 = sphi 0, %s31
    %s46 = sphi 0, %s32
    %s50 = sphi 0, %s50
    %s52 = sphi 0, %s50
    %s53 = sphi 0, %s52
    %s67 = sphi 0, %s53
    %s75 = sphi 0, %s77
    %s78 = sphi 0, %s75
    %s79 = sphi 0, %s78
    %s95 = sphi 0, %s79
  $region4: #{down4_forward.1} parent=0 // loop_header_branch
    %12 = sbr.rel (%p10) target = $region8
  $region5: #{down4_forward.1} parent=0 // loop_body
    %s14 = ssub.s32 %s9, 1
    %s15 = ssub.s32 %s9, 2
    %s22 = sadd.s32 1, %s17
    %p23 = scmp.ge.s32.totalorder %s22, 1
    %s24 = scalar_select %p23, 0, %s22
    %s25 = sadd.s32 1, %s16
    %s26 = scalar_select %p23, %s25, %s16
    %p27 = scmp.ge.s32.totalorder %s26, 2
    %s28 = scalar_select %p27, 0, %s26
    %s30 = sadd.s32 %s29, 1
    %p33 = scmp.eq.s32.totalorder %s9, 1
    %p34 = scmp.ne.s32.totalorder %s29, %s31
    %p35 = scmp.eq.s32.totalorder %s9, 0
    %p36 = por %p34, %p35
    %p37 = scmp.ne.s32.totalorder %s29, %s31
    %p38 = scmp.eq.s32.totalorder %s14, 1
    %p39 = por %p37, %p38
    %p40 = scmp.ne.s32.totalorder %s31, %s32
    %p41 = scmp.eq.s32.totalorder %s14, 0
    %p42 = por %p40, %p41
    %p43 = scmp.ne.s32.totalorder %s31, %s32
    %p44 = scmp.eq.s32.totalorder %s15, 1
    %p45 = por %p43, %p44
    %p47 = scmp.ne.s32.totalorder %s32, %s46
    %p48 = scmp.eq.s32.totalorder %s15, 0
    %p49 = por %p47, %p48
    %s51 = sadd.s32 %s50, 1
    %p54 = scmp.eq.s32.totalorder %s9, 1
    %p55 = scmp.ne.s32.totalorder %s50, %s52
    %p56 = scmp.eq.s32.totalorder %s9, 0
    %p57 = por %p55, %p56
    %p58 = scmp.ne.s32.totalorder %s50, %s52
    %p59 = scmp.eq.s32.totalorder %s14, 1
    %p60 = por %p58, %p59
    %p61 = scmp.ne.s32.totalorder %s52, %s53
    %p62 = scmp.eq.s32.totalorder %s14, 0
    %p63 = por %p61, %p62
    %p64 = scmp.ne.s32.totalorder %s52, %s53
    %p65 = scmp.eq.s32.totalorder %s15, 1
    %p66 = por %p64, %p65
    %p68 = scmp.ne.s32.totalorder %s53, %s67
    %p69 = scmp.eq.s32.totalorder %s15, 0
    %p70 = por %p68, %p69
    %s71 = ssub.s32 %s16, %s28
    %s72 = ssub.s32 %s17, %s24
    %s73 = sor.u32 %s71, %s72
    %p74 = scmp.eq.s32.totalorder %s73, 0
    %s76 = sadd.s32 %s75, 1
    %s77 = scalar_select %p74, %s75, %s76
    %p80 = pneg %p74
    %p81 = scmp.eq.s32.totalorder %s9, 1
    %p82 = por %p80, %p81
    %p83 = scmp.ne.s32.totalorder %s75, %s78
    %p84 = scmp.eq.s32.totalorder %s9, 0
    %p85 = por %p83, %p84
    %p86 = scmp.ne.s32.totalorder %s75, %s78
    %p87 = scmp.eq.s32.totalorder %s14, 1
    %p88 = por %p86, %p87
    %p89 = scmp.ne.s32.totalorder %s78, %s79
    %p90 = scmp.eq.s32.totalorder %s14, 0
    %p91 = por %p89, %p90
    %p92 = scmp.ne.s32.totalorder %s78, %s79
    %p93 = scmp.eq.s32.totalorder %s15, 1
    %p94 = por %p92, %p93
    %p96 = scmp.ne.s32.totalorder %s79, %s95
    %p97 = scmp.eq.s32.totalorder %s15, 0
    %p98 = por %p96, %p97
    %p99 = scmp.le.s32.totalorder 1, %s9
    %p100 = scmp.lt.s32.totalorder %s9, 3
    %p101 = pnand %p99, %p100
    %p102 = pneg %p101
    // Predicated region
    $region9: #{down4_forward.1} parent=5 // pred_check
      _
    $region10: #{down4_forward.1} parent=5 // pred_check_branch
      %104 = sbr.rel (%p101) target = $region12
    $region11: #{down4_forward.1} parent=5 // pred_region
      %s105 = ssub.s32 %s9, 1
      // Predicated region
      $region13: #{down4_forward.1} parent=11 // pred_check
        %p106 = pneg %p42
      $region14: #{down4_forward.1} parent=11 // pred_check_branch
        %108 = sbr.rel (%p106) target = $region16
      $region15: #{down4_forward.1} parent=11 // pred_region
        _
      $region16: #{down4_forward.1} parent=11 // pred_fallthru
        _
      // Predicated region
      $region17: #{down4_forward.1} parent=11 // pred_check
        %p109 = pneg %p63
      $region18: #{down4_forward.1} parent=11 // pred_check_branch
        %111 = sbr.rel (%p109) target = $region20
      $region19: #{down4_forward.1} parent=11 // pred_region
        _
      $region20: #{down4_forward.1} parent=11 // pred_fallthru
        _
    $region12: #{down4_forward.1} parent=5 // pred_fallthru
      _
    %p112 = scmp.lt.s32.totalorder %s9, 2
    // Predicated region
    $region21: #{down4_forward.1} parent=5 // pred_check
      %p113 = pneg %p112
    $region22: #{down4_forward.1} parent=5 // pred_check_branch
      %115 = sbr.rel (%p113) target = $region24
    $region23: #{down4_forward.1} parent=5 // pred_region
      _
    $region24: #{down4_forward.1} parent=5 // pred_fallthru
      _
    %p116 = scmp.le.s32.totalorder 1, %s9
    %p117 = scmp.lt.s32.totalorder %s9, 3
    %p118 = pnand %p116, %p117
    %p119 = pneg %p118
    // Predicated region
    $region25: #{down4_forward.1} parent=5 // pred_check
      _
    $region26: #{down4_forward.1} parent=5 // pred_check_branch
      %121 = sbr.rel (%p118) target = $region28
    $region27: #{down4_forward.1} parent=5 // pred_region
      %s122 = ssub.s32 %s9, 1
      %p123 = pneg %p42
      %p124 = pneg %p39
      %p125 = pneg %p63
      %p126 = pneg %p60
      %p127 = pneg %p91
      %p128 = pneg %p88
      %p129 = scmp.lt.s32.totalorder %s18, 1
      %s130 = scalar_select %p129, %s18, 1
      %p131 = scmp.lt.s32.totalorder %s19, 0
      %s132 = scalar_select %p131, %s19, 0
      %s133 = smul.addr %s130, 4
      %s134 = sadd.s32 %s132, %s133
      %s135 = smul.addr %s134, 4
      %s136 = scalar_lea.vmem %s3, %s135
      %p137 = scmp.lt.s32.totalorder %s18, 1
      %s138 = scalar_select %p137, %s18, 1
      %p139 = scmp.lt.s32.totalorder %s19, 0
      %s140 = scalar_select %p139, %s19, 0
      %s141 = smul.addr %s138, 4
      %s142 = sadd.s32 %s140, %s141
      %s143 = smul.addr %s142, 4
      %s144 = scalar_lea.vmem %s3, %s143
      %p146 = scmp.lt.s32.totalorder %s19, 0
      %s147 = ssub.s32 0, %s19
      %s148 = scalar_select %p146, %s147, %s19
      %s149 = sand.u32 %s148, 1
      %s150 = ssub.s32 0, %s149
      %s151 = scalar_select %p146, %s150, %s149
      %p152 = scmp.ne.s32.totalorder %s151, 0
      %p153 = scmp.lt.s32.totalorder %s151, 0
      %p154 = pnand %p153, %p152
      %p155 = pneg %p154
      %s156 = sadd.s32 %s151, 2
      %s157 = scalar_select %p155, %s156, %s151
      %p158 = scmp.eq.s32.totalorder %s19, 0
      // Predicated region
      $region29: #{down4_forward.1} parent=27 // pred_check
        %p159 = pneg %p158
      $region30: #{down4_forward.1} parent=27 // pred_check_branch
        %161 = sbr.rel (%p159) target = $region32
      $region31: #{down4_forward.1} parent=27 // pred_region
        %s162 = smul.u32 %s19, 128
        %s163 = sshra.s32 %s162, 7
        %s164 = sand.u32 %s162, 127
        %s165 = smul.u32 %s18, 16
        %s166 = sadd.s32 %s163, %s165
        %s167 = smul.addr %s166, 4
        %s168 = scalar_lea.vmem %s0, %s167
        %s169 = smul.u32 %s157, 16
        %s170 = smul.addr %s169, 4
        %s171 = scalar_lea.vmem [#allocation2], %s170
        %s172 = scalar_lea.sflag [#allocation3], %s157
        %p174 = scmp.lt.u32.totalorder 64, 8
        %p175 = pneg %p174
        // Predicated region
        $region33: #{down4_forward.1} parent=31 // pred_check
          _
        $region34: #{down4_forward.1} parent=31 // pred_check_branch
          %177 = sbr.rel (%p174) target = $region36
        $region35: #{down4_forward.1} parent=31 // pred_region
          %s193 = sand.u32 64, 7
          %p194 = scmp.eq.s32.totalorder %s193, 0
          // Predicated region
          $region48: #{down4_forward.1} parent=35 // pred_check
            %p195 = pneg %p194
          $region49: #{down4_forward.1} parent=35 // pred_check_branch
            %197 = sbr.rel (%p195) target = $region51
          $region50: #{down4_forward.1} parent=35 // pred_region
            loop: start=0, step=1, limit=1
            $region52: #{down4_forward.1} parent=50 // loop_pre_header
              _
            $region53: #{down4_forward.1} parent=50 // loop_header
              %s199 = sphi 0, %s203
              %p200 = scmp.ge.s32.totalorder %s199, 1
              %s204 = sphi %s168, %s168
              %s205 = sphi %s171, %s171
            $region54: #{down4_forward.1} parent=50 // loop_header_branch
              %202 = sbr.rel (%p200) target = $region58
            $region55: #{down4_forward.1} parent=50 // loop_body
              %v206 = vld [vmem:[%s204] sm:$0xff]
              %207 = vst [vmem:[%s205] sm:$0xff] %v206
              %v208 = vld [vmem:[%s204 + $0x8] sm:$0xff]
              %209 = vst [vmem:[%s205 + $0x8] sm:$0xff] %v208
              %v210 = vld [vmem:[%s204 + $0x10] sm:$0xff]
              %211 = vst [vmem:[%s205 + $0x10] sm:$0xff] %v210
              %v212 = vld [vmem:[%s204 + $0x18] sm:$0xff]
              %213 = vst [vmem:[%s205 + $0x18] sm:$0xff] %v212
              %v214 = vld [vmem:[%s204 + $0x20] sm:$0xff]
              %215 = vst [vmem:[%s205 + $0x20] sm:$0xff] %v214
              %v216 = vld [vmem:[%s204 + $0x28] sm:$0xff]
              %217 = vst [vmem:[%s205 + $0x28] sm:$0xff] %v216
              %v218 = vld [vmem:[%s204 + $0x30] sm:$0xff]
              %219 = vst [vmem:[%s205 + $0x30] sm:$0xff] %v218
              %v220 = vld [vmem:[%s204 + $0x38] sm:$0xff]
              %221 = vst [vmem:[%s205 + $0x38] sm:$0xff] %v220
            $region56: #{down4_forward.1} parent=50 // loop_footer
              %s203 = sadd.s32 1, %s199
            $region57: #{down4_forward.1} parent=50 // loop_footer_branch
              %198 = sbr.rel target = $region53
            $region58: #{down4_forward.1} parent=50 // loop_exit
              _
          $region51: #{down4_forward.1} parent=35 // pred_fallthru
            _
          %p222 = pneg %p194
          // Predicated region
          $region59: #{down4_forward.1} parent=35 // pred_check
            _
          $region60: #{down4_forward.1} parent=35 // pred_check_branch
            %224 = sbr.rel (%p194) target = $region62
          $region61: #{down4_forward.1} parent=35 // pred_region
            %s225 = sand.u32 64, 7
          $region62: #{down4_forward.1} parent=35 // pred_fallthru
            _
        $region36: #{down4_forward.1} parent=31 // pred_fallthru
          _
        // Predicated region
        $region37: #{down4_forward.1} parent=31 // pred_check
          %p178 = pneg %p174
        $region38: #{down4_forward.1} parent=31 // pred_check_branch
          %180 = sbr.rel (%p178) target = $region40
        $region39: #{down4_forward.1} parent=31 // pred_region
          %s181 = sshll.u32 1, 64
          %s182 = ssub.s32 %s181, 1
          loop: start=0, step=1, limit=1
          $region41: #{down4_forward.1} parent=39 // loop_pre_header
            _
          $region42: #{down4_forward.1} parent=39 // loop_header
            %s184 = sphi 0, %s188
            %p185 = scmp.ge.s32.totalorder %s184, 1
            %s189 = sphi %s168, %s168
            %s190 = sphi %s171, %s171
          $region43: #{down4_forward.1} parent=39 // loop_header_branch
            %187 = sbr.rel (%p185) target = $region47
          $region44: #{down4_forward.1} parent=39 // loop_body
            %v191 = vld [vmem:[%s189] sm:%s182]
            %192 = vst [vmem:[%s190] sm:%s182] %v191
          $region45: #{down4_forward.1} parent=39 // loop_footer
            %s188 = sadd.s32 1, %s184
          $region46: #{down4_forward.1} parent=39 // loop_footer_branch
            %183 = sbr.rel target = $region42
          $region47: #{down4_forward.1} parent=39 // loop_exit
            _
        $region40: #{down4_forward.1} parent=31 // pred_fallthru
          _
        // Predicated region
        $region63: #{down4_forward.1} parent=31 // pred_check
          _
        $region64: #{down4_forward.1} parent=31 // pred_check_branch
          %228 = sbr.rel (0) target = $region66
        $region65: #{down4_forward.1} parent=31 // pred_region
          %229 = vsyncadd %s172, 1024
        $region66: #{down4_forward.1} parent=31 // pred_fallthru
          _
      $region32: #{down4_forward.1} parent=27 // pred_fallthru
        _
      %s230 = scalar_lea.sflag [#allocation3], %s157
      %s231 = smul.u32 4, 4
      %s232 = smul.u32 %s231, 2
      %s233 = smul.u32 %s232, 2
      %s234 = sshll.u32 %s233, 4
      %235 = dma.done %s230, %s234
      %s236 = sadd.s32 %s19, 1
      %p237 = scmp.lt.s32.totalorder %s236, 1
      // Predicated region
      $region67: #{down4_forward.1} parent=27 // pred_check
        %p238 = pneg %p237
      $region68: #{down4_forward.1} parent=27 // pred_check_branch
        %240 = sbr.rel (%p238) target = $region70
      $region69: #{down4_forward.1} parent=27 // pred_region
        %s241 = ssub.s32 1, %s157
        %s242 = smul.u32 %s236, 128
        %s243 = sshra.s32 %s242, 7
        %s244 = sand.u32 %s242, 127
        %s245 = smul.u32 %s18, 16
        %s246 = sadd.s32 %s243, %s245
        %s247 = smul.addr %s246, 4
        %s248 = scalar_lea.vmem %s0, %s247
        %s249 = smul.u32 %s241, 16
        %s250 = smul.addr %s249, 4
        %s251 = scalar_lea.vmem [#allocation2], %s250
        %s252 = scalar_lea.sflag [#allocation3], %s241
        %p254 = scmp.lt.u32.totalorder 64, 8
        %p255 = pneg %p254
        // Predicated region
        $region71: #{down4_forward.1} parent=69 // pred_check
          _
        $region72: #{down4_forward.1} parent=69 // pred_check_branch
          %257 = sbr.rel (%p254) target = $region74
        $region73: #{down4_forward.1} parent=69 // pred_region
          %s273 = sand.u32 64, 7
          %p274 = scmp.eq.s32.totalorder %s273, 0
          // Predicated region
          $region86: #{down4_forward.1} parent=73 // pred_check
            %p275 = pneg %p274
          $region87: #{down4_forward.1} parent=73 // pred_check_branch
            %277 = sbr.rel (%p275) target = $region89
          $region88: #{down4_forward.1} parent=73 // pred_region
            loop: start=0, step=1, limit=1
            $region90: #{down4_forward.1} parent=88 // loop_pre_header
              _
            $region91: #{down4_forward.1} parent=88 // loop_header
              %s279 = sphi 0, %s283
              %p280 = scmp.ge.s32.totalorder %s279, 1
              %s284 = sphi %s248, %s248
              %s285 = sphi %s251, %s251
            $region92: #{down4_forward.1} parent=88 // loop_header_branch
              %282 = sbr.rel (%p280) target = $region96
            $region93: #{down4_forward.1} parent=88 // loop_body
              %v286 = vld [vmem:[%s284] sm:$0xff]
              %287 = vst [vmem:[%s285] sm:$0xff] %v286
              %v288 = vld [vmem:[%s284 + $0x8] sm:$0xff]
              %289 = vst [vmem:[%s285 + $0x8] sm:$0xff] %v288
              %v290 = vld [vmem:[%s284 + $0x10] sm:$0xff]
              %291 = vst [vmem:[%s285 + $0x10] sm:$0xff] %v290
              %v292 = vld [vmem:[%s284 + $0x18] sm:$0xff]
              %293 = vst [vmem:[%s285 + $0x18] sm:$0xff] %v292
              %v294 = vld [vmem:[%s284 + $0x20] sm:$0xff]
              %295 = vst [vmem:[%s285 + $0x20] sm:$0xff] %v294
              %v296 = vld [vmem:[%s284 + $0x28] sm:$0xff]
              %297 = vst [vmem:[%s285 + $0x28] sm:$0xff] %v296
              %v298 = vld [vmem:[%s284 + $0x30] sm:$0xff]
              %299 = vst [vmem:[%s285 + $0x30] sm:$0xff] %v298
              %v300 = vld [vmem:[%s284 + $0x38] sm:$0xff]
              %301 = vst [vmem:[%s285 + $0x38] sm:$0xff] %v300
            $region94: #{down4_forward.1} parent=88 // loop_footer
              %s283 = sadd.s32 1, %s279
            $region95: #{down4_forward.1} parent=88 // loop_footer_branch
              %278 = sbr.rel target = $region91
            $region96: #{down4_forward.1} parent=88 // loop_exit
              _
          $region89: #{down4_forward.1} parent=73 // pred_fallthru
            _
          %p302 = pneg %p274
          // Predicated region
          $region97: #{down4_forward.1} parent=73 // pred_check
            _
          $region98: #{down4_forward.1} parent=73 // pred_check_branch
            %304 = sbr.rel (%p274) target = $region100
          $region99: #{down4_forward.1} parent=73 // pred_region
            %s305 = sand.u32 64, 7
          $region100: #{down4_forward.1} parent=73 // pred_fallthru
            _
        $region74: #{down4_forward.1} parent=69 // pred_fallthru
          _
        // Predicated region
        $region75: #{down4_forward.1} parent=69 // pred_check
          %p258 = pneg %p254
        $region76: #{down4_forward.1} parent=69 // pred_check_branch
          %260 = sbr.rel (%p258) target = $region78
        $region77: #{down4_forward.1} parent=69 // pred_region
          %s261 = sshll.u32 1, 64
          %s262 = ssub.s32 %s261, 1
          loop: start=0, step=1, limit=1
          $region79: #{down4_forward.1} parent=77 // loop_pre_header
            _
          $region80: #{down4_forward.1} parent=77 // loop_header
            %s264 = sphi 0, %s268
            %p265 = scmp.ge.s32.totalorder %s264, 1
            %s269 = sphi %s248, %s248
            %s270 = sphi %s251, %s251
          $region81: #{down4_forward.1} parent=77 // loop_header_branch
            %267 = sbr.rel (%p265) target = $region85
          $region82: #{down4_forward.1} parent=77 // loop_body
            %v271 = vld [vmem:[%s269] sm:%s262]
            %272 = vst [vmem:[%s270] sm:%s262] %v271
          $region83: #{down4_forward.1} parent=77 // loop_footer
            %s268 = sadd.s32 1, %s264
          $region84: #{down4_forward.1} parent=77 // loop_footer_branch
            %263 = sbr.rel target = $region80
          $region85: #{down4_forward.1} parent=77 // loop_exit
            _
        $region78: #{down4_forward.1} parent=69 // pred_fallthru
          _
        // Predicated region
        $region101: #{down4_forward.1} parent=69 // pred_check
          _
        $region102: #{down4_forward.1} parent=69 // pred_check_branch
          %308 = sbr.rel (0) target = $region104
        $region103: #{down4_forward.1} parent=69 // pred_region
          %309 = vsyncadd %s252, 1024
        $region104: #{down4_forward.1} parent=69 // pred_fallthru
          _
      $region70: #{down4_forward.1} parent=27 // pred_fallthru
        _
      %v310 = vld [vmem:[%s2] sm:$0xff]
      %v311 = vld [vmem:[%s2 + $0x8] sm:$0xff]
      %v312 = vld [vmem:[%s2 + $0x10] sm:$0xff]
      %v313 = vld [vmem:[%s2 + $0x18] sm:$0xff]
      %s314 = smul.u32 %s157, 16
      %s315 = smul.addr %s314, 4
      %s316 = scalar_lea.vmem [#allocation2], %s315
      %v317 = vld [vmem:[%s316] sm:$0xf]
      %v318 = vld [vmem:[%s316 + $0x8] sm:$0xf]
      %v319 = vld [vmem:[%s1] sm:$0xf]
      %v320 = vld [vmem:[%s1 + $0x4] sm:$0xf]
      %v321 = vld [vmem:[%s1 + $0x8] sm:$0xf]
      %v322 = vld [vmem:[%s1 + $0xc] sm:$0xf]
      %s323 = sadd.s32 4, %s314
      %s324 = smul.addr %s323, 4
      %s325 = scalar_lea.vmem [#allocation2], %s324
      %v326 = vld [vmem:[%s325] sm:$0xf]
      %v327 = vld [vmem:[%s325 + $0x8] sm:$0xf]
      %s328 = scalar_lea.vmem %s1, 16
      %v329 = vld [vmem:[%s328] sm:$0xf]
      %v330 = vld [vmem:[%s328 + $0x4] sm:$0xf]
      %v331 = vld [vmem:[%s328 + $0x8] sm:$0xf]
      %v332 = vld [vmem:[%s328 + $0xc] sm:$0xf]
      %v337 = vunpack.c.l.b16 %v329
      %v338 = vunpack.c.l.b16 %v330
      %v339 = vunpack.c.l.b16 %v331
      %v340 = vunpack.c.l.b16 %v332
      %v341 = vpack.c.b16 %v338, %v337
      %v342 = vpack.c.b16 %v340, %v339
      %v345 = vunpack.c.l.b16 %v326
      %v346 = vunpack.c.l.b16 %v327
      %v347 = vpack.c.b16 %v346, %v345
      %vm349 = vcmask 130048
      %v351 = vsel %vm349, %v341, 0
      %v354 = vsel %vm349, %v342, 0
      %356 = vmatprep.subr.bf16.mxu0 0
      %357 = vmatpush1.bf16.msra.mxu0 0
      %358 = vmatprep.subr.bf16.mxu0 0
      %359 = vmatpush1.bf16.msra.mxu0 0
      %360 = vmatprep.subr.bf16.mxu0 0
      %361 = vmatpush1.bf16.msra.mxu0 0
      %362 = vmatprep.subr.bf16.mxu0 0
      %363 = vmatpush1.bf16.msra.mxu0 0
      %364 = vmatprep.subr.bf16.mxu0 0
      %365 = vmatpush1.bf16.msra.mxu0 0
      %366 = vmatprep.subr.bf16.mxu0 0
      %367 = vmatpush1.bf16.msra.mxu0 0
      %368 = vmatprep.subr.bf16.mxu0 0
      %369 = vmatpush1.bf16.msra.mxu0 0
      %370 = vmatprep.subr.bf16.mxu0 0
      %371 = vmatpush1.bf16.msra.mxu0 %v347
      %372 = vmatprep.subr.bf16.mxu0 0
      %373 = vmatpush2.bf16.msra.mxu0 0
      %374 = vmatprep.subr.bf16.mxu0 0
      %375 = vmatpush2.bf16.msra.mxu0 0
      %376 = vmatprep.subr.bf16.mxu0 0
      %377 = vmatpush2.bf16.msra.mxu0 0
      %378 = vmatprep.subr.bf16.mxu0 0
      %379 = vmatpush2.bf16.msra.mxu0 0
      %380 = vmatprep.subr.bf16.mxu0 0
      %381 = vmatpush2.bf16.msra.mxu0 0
      %382 = vmatprep.subr.bf16.mxu0 0
      %383 = vmatpush2.bf16.msra.mxu0 0
      %384 = vmatprep.subr.bf16.mxu0 0
      %385 = vmatpush2.bf16.msra.mxu0 0
      %386 = vmatprep.subr.bf16.mxu0 0
      %387 = vmatpush2.bf16.msra.mxu0 0
      %388 = vmatprep.mubr.bf16.mxu0 0
      %389 = vmatmul.mubr.bf16.gmra.mxu0 %v351
      %v390 = vpop.f32.mrf.mxu0
      %v391 = vadd.f32 0.0, %v390
      %v392 = vpop.f32.mrf.mxu0
      %v393 = vpop.f32.mrf.mxu0
      %v394 = vadd.f32 0.0, %v393
      %v395 = vpop.f32.mrf.mxu0
      %396 = vmatprep.mubr.bf16.mxu0 0
      %397 = vmatmul.mubr.bf16.gmra.mxu0 %v354
      %v398 = vpop.f32.mrf.mxu0
      %v399 = vadd.f32 0.0, %v398
      %v400 = vpop.f32.mrf.mxu0
      %v401 = vpop.f32.mrf.mxu0
      %v402 = vadd.f32 0.0, %v401
      %v403 = vpop.f32.mrf.mxu0
      %404 = vdwg.mxu0
      %v409 = vunpack.c.l.b16 %v319
      %v410 = vunpack.c.l.b16 %v320
      %v411 = vunpack.c.l.b16 %v321
      %v412 = vunpack.c.l.b16 %v322
      %v413 = vpack.c.b16 %v410, %v409
      %v414 = vpack.c.b16 %v412, %v411
      %v417 = vunpack.c.l.b16 %v317
      %v418 = vunpack.c.l.b16 %v318
      %v419 = vpack.c.b16 %v418, %v417
      %v422 = vsel %vm349, %v413, 0
      %v425 = vsel %vm349, %v414, 0
      %427 = vmatprep.subr.bf16.mxu0 0
      %428 = vmatpush1.bf16.msra.mxu0 0
      %429 = vmatprep.subr.bf16.mxu0 0
      %430 = vmatpush1.bf16.msra.mxu0 0
      %431 = vmatprep.subr.bf16.mxu0 0
      %432 = vmatpush1.bf16.msra.mxu0 0
      %433 = vmatprep.subr.bf16.mxu0 0
      %434 = vmatpush1.bf16.msra.mxu0 0
      %435 = vmatprep.subr.bf16.mxu0 0
      %436 = vmatpush1.bf16.msra.mxu0 0
      %437 = vmatprep.subr.bf16.mxu0 0
      %438 = vmatpush1.bf16.msra.mxu0 0
      %439 = vmatprep.subr.bf16.mxu0 0
      %440 = vmatpush1.bf16.msra.mxu0 0
      %441 = vmatprep.subr.bf16.mxu0 0
      %442 = vmatpush1.bf16.msra.mxu0 %v419
      %443 = vmatprep.subr.bf16.mxu0 0
      %444 = vmatpush2.bf16.msra.mxu0 0
      %445 = vmatprep.subr.bf16.mxu0 0
      %446 = vmatpush2.bf16.msra.mxu0 0
      %447 = vmatprep.subr.bf16.mxu0 0
      %448 = vmatpush2.bf16.msra.mxu0 0
      %449 = vmatprep.subr.bf16.mxu0 0
      %450 = vmatpush2.bf16.msra.mxu0 0
      %451 = vmatprep.subr.bf16.mxu0 0
      %452 = vmatpush2.bf16.msra.mxu0 0
      %453 = vmatprep.subr.bf16.mxu0 0
      %454 = vmatpush2.bf16.msra.mxu0 0
      %455 = vmatprep.subr.bf16.mxu0 0
      %456 = vmatpush2.bf16.msra.mxu0 0
      %457 = vmatprep.subr.bf16.mxu0 0
      %458 = vmatpush2.bf16.msra.mxu0 0
      %459 = vmatprep.mubr.bf16.mxu0 0
      %460 = vmatmul.mubr.bf16.gmra.mxu0 %v422
      %v461 = vpop.f32.mrf.mxu0
      %v462 = vadd.f32 %v391, %v461
      %v463 = vpop.f32.mrf.mxu0
      %v464 = vpop.f32.mrf.mxu0
      %v465 = vadd.f32 %v394, %v464
      %v466 = vpop.f32.mrf.mxu0
      %467 = vmatprep.mubr.bf16.mxu0 0
      %468 = vmatmul.mubr.bf16.gmra.mxu0 %v425
      %v469 = vpop.f32.mrf.mxu0
      %v470 = vadd.f32 %v399, %v469
      %v471 = vpop.f32.mrf.mxu0
      %v472 = vpop.f32.mrf.mxu0
      %v473 = vadd.f32 %v402, %v472
      %v474 = vpop.f32.mrf.mxu0
      %475 = vdwg.mxu0
      %v476 = vld [vmem:[%s316] sm:$0xff]
      %v477 = vld [vmem:[%s316 + $0x8] sm:$0xff]
      %s478 = scalar_lea.vmem %s1, 32
      %v479 = vld [vmem:[%s478] sm:$0xf]
      %v480 = vld [vmem:[%s478 + $0x4] sm:$0xf]
      %v481 = vld [vmem:[%s478 + $0x8] sm:$0xf]
      %v482 = vld [vmem:[%s478 + $0xc] sm:$0xf]
      %v487 = vunpack.c.l.b16 %v479
      %v488 = vunpack.c.l.b16 %v480
      %v489 = vunpack.c.l.b16 %v481
      %v490 = vunpack.c.l.b16 %v482
      %v491 = vpack.c.b16 %v488, %v487
      %v492 = vpack.c.b16 %v490, %v489
      %v495 = vunpack.c.l.b16 %v476
      %v496 = vunpack.c.h.b16 %v476
      %v497 = vunpack.c.l.b16 %v477
      %v498 = vunpack.c.h.b16 %v477
      %v499 = vpack.c.b16 %v497, %v495
      %v500 = vpack.c.b16 %v498, %v496
      %501 = vrot.lane.b32.xlu0 %v499, 127
      %v502 = vpop.permute.xlu0 %501
      %503 = vrot.lane.b32.xlu0 %v500, 127
      %v504 = vpop.permute.xlu0 %503
      %vm505 = vcmask 1039360
      %v506 = vsel %vm505, %v502, %v504
      %v509 = vsel %vm349, %v491, 0
      %v512 = vsel %vm349, %v492, 0
      %514 = vmatprep.subr.bf16.mxu0 0
      %515 = vmatpush1.bf16.msra.mxu0 0
      %516 = vmatprep.subr.bf16.mxu0 0
      %517 = vmatpush1.bf16.msra.mxu0 0
      %518 = vmatprep.subr.bf16.mxu0 0
      %519 = vmatpush1.bf16.msra.mxu0 0
      %520 = vmatprep.subr.bf16.mxu0 0
      %521 = vmatpush1.bf16.msra.mxu0 0
      %522 = vmatprep.subr.bf16.mxu0 0
      %523 = vmatpush1.bf16.msra.mxu0 0
      %524 = vmatprep.subr.bf16.mxu0 0
      %525 = vmatpush1.bf16.msra.mxu0 0
      %526 = vmatprep.subr.bf16.mxu0 0
      %527 = vmatpush1.bf16.msra.mxu0 0
      %528 = vmatprep.subr.bf16.mxu0 0
      %529 = vmatpush1.bf16.msra.mxu0 %v506
      %530 = vmatprep.subr.bf16.mxu0 0
      %531 = vmatpush2.bf16.msra.mxu0 0
      %532 = vmatprep.subr.bf16.mxu0 0
      %533 = vmatpush2.bf16.msra.mxu0 0
      %534 = vmatprep.subr.bf16.mxu0 0
      %535 = vmatpush2.bf16.msra.mxu0 0
      %536 = vmatprep.subr.bf16.mxu0 0
      %537 = vmatpush2.bf16.msra.mxu0 0
      %538 = vmatprep.subr.bf16.mxu0 0
      %539 = vmatpush2.bf16.msra.mxu0 0
      %540 = vmatprep.subr.bf16.mxu0 0
      %541 = vmatpush2.bf16.msra.mxu0 0
      %542 = vmatprep.subr.bf16.mxu0 0
      %543 = vmatpush2.bf16.msra.mxu0 0
      %544 = vmatprep.subr.bf16.mxu0 0
      %545 = vmatpush2.bf16.msra.mxu0 0
      %546 = vmatprep.mubr.bf16.mxu0 0
      %547 = vmatmul.mubr.bf16.gmra.mxu0 %v509
      %v548 = vpop.f32.mrf.mxu0
      %v549 = vadd.f32 0.0, %v548
      %v550 = vpop.f32.mrf.mxu0
      %v551 = vpop.f32.mrf.mxu0
      %v552 = vadd.f32 0.0, %v551
      %v553 = vpop.f32.mrf.mxu0
      %554 = vmatprep.mubr.bf16.mxu0 0
      %555 = vmatmul.mubr.bf16.gmra.mxu0 %v512
      %v556 = vpop.f32.mrf.mxu0
      %v557 = vadd.f32 0.0, %v556
      %v558 = vpop.f32.mrf.mxu0
      %v559 = vpop.f32.mrf.mxu0
      %v560 = vadd.f32 0.0, %v559
      %v561 = vpop.f32.mrf.mxu0
      %562 = vdwg.mxu0
      %v563 = vadd.f32 %v462, %v549
      %v564 = vadd.f32 %v465, %v552
      %v565 = vadd.f32 %v470, %v557
      %v566 = vadd.f32 %v473, %v560
      %s567 = sadd.s32 8, %s314
      %s568 = smul.addr %s567, 4
      %s569 = scalar_lea.vmem [#allocation2], %s568
      %v570 = vld [vmem:[%s569] sm:$0xf]
      %v571 = vld [vmem:[%s569 + $0x8] sm:$0xf]
      %s572 = scalar_lea.vmem %s1, 48
      %v573 = vld [vmem:[%s572] sm:$0xf]
      %v574 = vld [vmem:[%s572 + $0x4] sm:$0xf]
      %v575 = vld [vmem:[%s572 + $0x8] sm:$0xf]
      %v576 = vld [vmem:[%s572 + $0xc] sm:$0xf]
      %v581 = vunpack.c.l.b16 %v573
      %v582 = vunpack.c.l.b16 %v574
      %v583 = vunpack.c.l.b16 %v575
      %v584 = vunpack.c.l.b16 %v576
      %v585 = vpack.c.b16 %v582, %v581
      %v586 = vpack.c.b16 %v584, %v583
      %v589 = vunpack.c.l.b16 %v570
      %v590 = vunpack.c.l.b16 %v571
      %v591 = vpack.c.b16 %v590, %v589
      %v594 = vsel %vm349, %v585, 0
      %v597 = vsel %vm349, %v586, 0
      %599 = vmatprep.subr.bf16.mxu0 0
      %600 = vmatpush1.bf16.msra.mxu0 0
      %601 = vmatprep.subr.bf16.mxu0 0
      %602 = vmatpush1.bf16.msra.mxu0 0
      %603 = vmatprep.subr.bf16.mxu0 0
      %604 = vmatpush1.bf16.msra.mxu0 0
      %605 = vmatprep.subr.bf16.mxu0 0
      %606 = vmatpush1.bf16.msra.mxu0 0
      %607 = vmatprep.subr.bf16.mxu0 0
      %608 = vmatpush1.bf16.msra.mxu0 0
      %609 = vmatprep.subr.bf16.mxu0 0
      %610 = vmatpush1.bf16.msra.mxu0 0
      %611 = vmatprep.subr.bf16.mxu0 0
      %612 = vmatpush1.bf16.msra.mxu0 0
      %613 = vmatprep.subr.bf16.mxu0 0
      %614 = vmatpush1.bf16.msra.mxu0 %v591
      %615 = vmatprep.subr.bf16.mxu0 0
      %616 = vmatpush2.bf16.msra.mxu0 0
      %617 = vmatprep.subr.bf16.mxu0 0
      %618 = vmatpush2.bf16.msra.mxu0 0
      %619 = vmatprep.subr.bf16.mxu0 0
      %620 = vmatpush2.bf16.msra.mxu0 0
      %621 = vmatprep.subr.bf16.mxu0 0
      %622 = vmatpush2.bf16.msra.mxu0 0
      %623 = vmatprep.subr.bf16.mxu0 0
      %624 = vmatpush2.bf16.msra.mxu0 0
      %625 = vmatprep.subr.bf16.mxu0 0
      %626 = vmatpush2.bf16.msra.mxu0 0
      %627 = vmatprep.subr.bf16.mxu0 0
      %628 = vmatpush2.bf16.msra.mxu0 0
      %629 = vmatprep.subr.bf16.mxu0 0
      %630 = vmatpush2.bf16.msra.mxu0 0
      %631 = vmatprep.mubr.bf16.mxu0 0
      %632 = vmatmul.mubr.bf16.gmra.mxu0 %v594
      %v633 = vpop.f32.mrf.mxu0
      %v634 = vadd.f32 0.0, %v633
      %v635 = vpop.f32.mrf.mxu0
      %v636 = vpop.f32.mrf.mxu0
      %v637 = vadd.f32 0.0, %v636
      %v638 = vpop.f32.mrf.mxu0
      %639 = vmatprep.mubr.bf16.mxu0 0
      %640 = vmatmul.mubr.bf16.gmra.mxu0 %v597
      %v641 = vpop.f32.mrf.mxu0
      %v642 = vadd.f32 0.0, %v641
      %v643 = vpop.f32.mrf.mxu0
      %v644 = vpop.f32.mrf.mxu0
      %v645 = vadd.f32 0.0, %v644
      %v646 = vpop.f32.mrf.mxu0
      %647 = vdwg.mxu0
      %v648 = vadd.f32 %v563, %v634
      %v649 = vadd.f32 %v564, %v637
      %v650 = vadd.f32 %v565, %v642
      %v651 = vadd.f32 %v566, %v645
      %s652 = sadd.s32 12, %s314
      %s653 = smul.addr %s652, 4
      %s654 = scalar_lea.vmem [#allocation2], %s653
      %v655 = vld [vmem:[%s654] sm:$0xf]
      %v656 = vld [vmem:[%s654 + $0x8] sm:$0xf]
      %s657 = scalar_lea.vmem %s1, 64
      %v658 = vld [vmem:[%s657] sm:$0xf]
      %v659 = vld [vmem:[%s657 + $0x4] sm:$0xf]
      %v660 = vld [vmem:[%s657 + $0x8] sm:$0xf]
      %v661 = vld [vmem:[%s657 + $0xc] sm:$0xf]
      %v666 = vunpack.c.l.b16 %v658
      %v667 = vunpack.c.l.b16 %v659
      %v668 = vunpack.c.l.b16 %v660
      %v669 = vunpack.c.l.b16 %v661
      %v670 = vpack.c.b16 %v667, %v666
      %v671 = vpack.c.b16 %v669, %v668
      %v674 = vunpack.c.l.b16 %v655
      %v675 = vunpack.c.l.b16 %v656
      %v676 = vpack.c.b16 %v675, %v674
      %v679 = vsel %vm349, %v670, 0
      %v682 = vsel %vm349, %v671, 0
      %684 = vmatprep.subr.bf16.mxu0 0
      %685 = vmatpush1.bf16.msra.mxu0 0
      %686 = vmatprep.subr.bf16.mxu0 0
      %687 = vmatpush1.bf16.msra.mxu0 0
      %688 = vmatprep.subr.bf16.mxu0 0
      %689 = vmatpush1.bf16.msra.mxu0 0
      %690 = vmatprep.subr.bf16.mxu0 0
      %691 = vmatpush1.bf16.msra.mxu0 0
      %692 = vmatprep.subr.bf16.mxu0 0
      %693 = vmatpush1.bf16.msra.mxu0 0
      %694 = vmatprep.subr.bf16.mxu0 0
      %695 = vmatpush1.bf16.msra.mxu0 0
      %696 = vmatprep.subr.bf16.mxu0 0
      %697 = vmatpush1.bf16.msra.mxu0 0
      %698 = vmatprep.subr.bf16.mxu0 0
      %699 = vmatpush1.bf16.msra.mxu0 %v676
      %700 = vmatprep.subr.bf16.mxu0 0
      %701 = vmatpush2.bf16.msra.mxu0 0
      %702 = vmatprep.subr.bf16.mxu0 0
      %703 = vmatpush2.bf16.msra.mxu0 0
      %704 = vmatprep.subr.bf16.mxu0 0
      %705 = vmatpush2.bf16.msra.mxu0 0
      %706 = vmatprep.subr.bf16.mxu0 0
      %707 = vmatpush2.bf16.msra.mxu0 0
      %708 = vmatprep.subr.bf16.mxu0 0
      %709 = vmatpush2.bf16.msra.mxu0 0
      %710 = vmatprep.subr.bf16.mxu0 0
      %711 = vmatpush2.bf16.msra.mxu0 0
      %712 = vmatprep.subr.bf16.mxu0 0
      %713 = vmatpush2.bf16.msra.mxu0 0
      %714 = vmatprep.subr.bf16.mxu0 0
      %715 = vmatpush2.bf16.msra.mxu0 0
      %716 = vmatprep.mubr.bf16.mxu0 0
      %717 = vmatmul.mubr.bf16.gmra.mxu0 %v679
      %v718 = vpop.f32.mrf.mxu0
      %v719 = vadd.f32 0.0, %v718
      %v720 = vpop.f32.mrf.mxu0
      %v721 = vpop.f32.mrf.mxu0
      %v722 = vadd.f32 0.0, %v721
      %v723 = vpop.f32.mrf.mxu0
      %724 = vmatprep.mubr.bf16.mxu0 0
      %725 = vmatmul.mubr.bf16.gmra.mxu0 %v682
      %v726 = vpop.f32.mrf.mxu0
      %v727 = vadd.f32 0.0, %v726
      %v728 = vpop.f32.mrf.mxu0
      %v729 = vpop.f32.mrf.mxu0
      %v730 = vadd.f32 0.0, %v729
      %v731 = vpop.f32.mrf.mxu0
      %732 = vdwg.mxu0
      %v733 = vadd.f32 %v648, %v719
      %v734 = vadd.f32 %v649, %v722
      %v735 = vadd.f32 %v650, %v727
      %v736 = vadd.f32 %v651, %v730
      %v737 = vld [vmem:[%s569] sm:$0xff]
      %v738 = vld [vmem:[%s569 + $0x8] sm:$0xff]
      %s739 = scalar_lea.vmem %s1, 80
      %v740 = vld [vmem:[%s739] sm:$0xf]
      %v741 = vld [vmem:[%s739 + $0x4] sm:$0xf]
      %v742 = vld [vmem:[%s739 + $0x8] sm:$0xf]
      %v743 = vld [vmem:[%s739 + $0xc] sm:$0xf]
      %v748 = vunpack.c.l.b16 %v740
      %v749 = vunpack.c.l.b16 %v741
      %v750 = vunpack.c.l.b16 %v742
      %v751 = vunpack.c.l.b16 %v743
      %v752 = vpack.c.b16 %v749, %v748
      %v753 = vpack.c.b16 %v751, %v750
      %v756 = vunpack.c.l.b16 %v737
      %v757 = vunpack.c.h.b16 %v737
      %v758 = vunpack.c.l.b16 %v738
      %v759 = vunpack.c.h.b16 %v738
      %v760 = vpack.c.b16 %v758, %v756
      %v761 = vpack.c.b16 %v759, %v757
      %762 = vrot.lane.b32.xlu0 %v760, 127
      %v763 = vpop.permute.xlu0 %762
      %764 = vrot.lane.b32.xlu0 %v761, 127
      %v765 = vpop.permute.xlu0 %764
      %v766 = vsel %vm505, %v763, %v765
      %v769 = vsel %vm349, %v752, 0
      %v772 = vsel %vm349, %v753, 0
      %774 = vmatprep.subr.bf16.mxu0 0
      %775 = vmatpush1.bf16.msra.mxu0 0
      %776 = vmatprep.subr.bf16.mxu0 0
      %777 = vmatpush1.bf16.msra.mxu0 0
      %778 = vmatprep.subr.bf16.mxu0 0
      %779 = vmatpush1.bf16.msra.mxu0 0
      %780 = vmatprep.subr.bf16.mxu0 0
      %781 = vmatpush1.bf16.msra.mxu0 0
      %782 = vmatprep.subr.bf16.mxu0 0
      %783 = vmatpush1.bf16.msra.mxu0 0
      %784 = vmatprep.subr.bf16.mxu0 0
      %785 = vmatpush1.bf16.msra.mxu0 0
      %786 = vmatprep.subr.bf16.mxu0 0
      %787 = vmatpush1.bf16.msra.mxu0 0
      %788 = vmatprep.subr.bf16.mxu0 0
      %789 = vmatpush1.bf16.msra.mxu0 %v766
      %790 = vmatprep.subr.bf16.mxu0 0
      %791 = vmatpush2.bf16.msra.mxu0 0
      %792 = vmatprep.subr.bf16.mxu0 0
      %793 = vmatpush2.bf16.msra.mxu0 0
      %794 = vmatprep.subr.bf16.mxu0 0
      %795 = vmatpush2.bf16.msra.mxu0 0
      %796 = vmatprep.subr.bf16.mxu0 0
      %797 = vmatpush2.bf16.msra.mxu0 0
      %798 = vmatprep.subr.bf16.mxu0 0
      %799 = vmatpush2.bf16.msra.mxu0 0
      %800 = vmatprep.subr.bf16.mxu0 0
      %801 = vmatpush2.bf16.msra.mxu0 0
      %802 = vmatprep.subr.bf16.mxu0 0
      %803 = vmatpush2.bf16.msra.mxu0 0
      %804 = vmatprep.subr.bf16.mxu0 0
      %805 = vmatpush2.bf16.msra.mxu0 0
      %806 = vmatprep.mubr.bf16.mxu0 0
      %807 = vmatmul.mubr.bf16.gmra.mxu0 %v769
      %v808 = vpop.f32.mrf.mxu0
      %v809 = vadd.f32 0.0, %v808
      %v810 = vpop.f32.mrf.mxu0
      %v811 = vpop.f32.mrf.mxu0
      %v812 = vadd.f32 0.0, %v811
      %v813 = vpop.f32.mrf.mxu0
      %814 = vmatprep.mubr.bf16.mxu0 0
      %815 = vmatmul.mubr.bf16.gmra.mxu0 %v772
      %v816 = vpop.f32.mrf.mxu0
      %v817 = vadd.f32 0.0, %v816
      %v818 = vpop.f32.mrf.mxu0
      %v819 = vpop.f32.mrf.mxu0
      %v820 = vadd.f32 0.0, %v819
      %v821 = vpop.f32.mrf.mxu0
      %822 = vdwg.mxu0
      %v823 = vadd.f32 %v733, %v809
      %v824 = vadd.f32 %v734, %v812
      %v825 = vadd.f32 %v735, %v817
      %v826 = vadd.f32 %v736, %v820
      %s827 = scalar_lea.vmem %s1, 96
      %v828 = vld [vmem:[%s827] sm:$0xf]
      %v829 = vld [vmem:[%s827 + $0x4] sm:$0xf]
      %v830 = vld [vmem:[%s827 + $0x8] sm:$0xf]
      %v831 = vld [vmem:[%s827 + $0xc] sm:$0xf]
      %v836 = vunpack.c.l.b16 %v828
      %v837 = vunpack.c.l.b16 %v829
      %v838 = vunpack.c.l.b16 %v830
      %v839 = vunpack.c.l.b16 %v831
      %v840 = vpack.c.b16 %v837, %v836
      %v841 = vpack.c.b16 %v839, %v838
      %842 = vrot.lane.b32.xlu0 %v499, 119
      %v843 = vpop.permute.xlu0 %842
      %844 = vrot.lane.b32.xlu0 %v500, 119
      %v845 = vpop.permute.xlu0 %844
      %vm846 = vcmask 973824
      %v847 = vsel %vm846, %v843, %v845
      %v850 = vsel %vm349, %v840, 0
      %v853 = vsel %vm349, %v841, 0
      %855 = vmatprep.subr.bf16.mxu0 0
      %856 = vmatpush1.bf16.msra.mxu0 0
      %857 = vmatprep.subr.bf16.mxu0 0
      %858 = vmatpush1.bf16.msra.mxu0 0
      %859 = vmatprep.subr.bf16.mxu0 0
      %860 = vmatpush1.bf16.msra.mxu0 0
      %861 = vmatprep.subr.bf16.mxu0 0
      %862 = vmatpush1.bf16.msra.mxu0 0
      %863 = vmatprep.subr.bf16.mxu0 0
      %864 = vmatpush1.bf16.msra.mxu0 0
      %865 = vmatprep.subr.bf16.mxu0 0
      %866 = vmatpush1.bf16.msra.mxu0 0
      %867 = vmatprep.subr.bf16.mxu0 0
      %868 = vmatpush1.bf16.msra.mxu0 0
      %869 = vmatprep.subr.bf16.mxu0 0
      %870 = vmatpush1.bf16.msra.mxu0 %v847
      %871 = vmatprep.subr.bf16.mxu0 0
      %872 = vmatpush2.bf16.msra.mxu0 0
      %873 = vmatprep.subr.bf16.mxu0 0
      %874 = vmatpush2.bf16.msra.mxu0 0
      %875 = vmatprep.subr.bf16.mxu0 0
      %876 = vmatpush2.bf16.msra.mxu0 0
      %877 = vmatprep.subr.bf16.mxu0 0
      %878 = vmatpush2.bf16.msra.mxu0 0
      %879 = vmatprep.subr.bf16.mxu0 0
      %880 = vmatpush2.bf16.msra.mxu0 0
      %881 = vmatprep.subr.bf16.mxu0 0
      %882 = vmatpush2.bf16.msra.mxu0 0
      %883 = vmatprep.subr.bf16.mxu0 0
      %884 = vmatpush2.bf16.msra.mxu0 0
      %885 = vmatprep.subr.bf16.mxu0 0
      %886 = vmatpush2.bf16.msra.mxu0 0
      %887 = vmatprep.mubr.bf16.mxu0 0
      %888 = vmatmul.mubr.bf16.gmra.mxu0 %v850
      %v889 = vpop.f32.mrf.mxu0
      %v890 = vadd.f32 0.0, %v889
      %v891 = vpop.f32.mrf.mxu0
      %v892 = vpop.f32.mrf.mxu0
      %v893 = vadd.f32 0.0, %v892
      %v894 = vpop.f32.mrf.mxu0
      %895 = vmatprep.mubr.bf16.mxu0 0
      %896 = vmatmul.mubr.bf16.gmra.mxu0 %v853
      %v897 = vpop.f32.mrf.mxu0
      %v898 = vadd.f32 0.0, %v897
      %v899 = vpop.f32.mrf.mxu0
      %v900 = vpop.f32.mrf.mxu0
      %v901 = vadd.f32 0.0, %v900
      %v902 = vpop.f32.mrf.mxu0
      %903 = vdwg.mxu0
      %v904 = vadd.f32 %v823, %v890
      %v905 = vadd.f32 %v824, %v893
      %v906 = vadd.f32 %v825, %v898
      %v907 = vadd.f32 %v826, %v901
      %v908 = vld [vmem:[%s325] sm:$0xff]
      %v909 = vld [vmem:[%s325 + $0x8] sm:$0xff]
      %s910 = scalar_lea.vmem %s1, 112
      %v911 = vld [vmem:[%s910] sm:$0xf]
      %v912 = vld [vmem:[%s910 + $0x4] sm:$0xf]
      %v913 = vld [vmem:[%s910 + $0x8] sm:$0xf]
      %v914 = vld [vmem:[%s910 + $0xc] sm:$0xf]
      %v919 = vunpack.c.l.b16 %v911
      %v920 = vunpack.c.l.b16 %v912
      %v921 = vunpack.c.l.b16 %v913
      %v922 = vunpack.c.l.b16 %v914
      %v923 = vpack.c.b16 %v920, %v919
      %v924 = vpack.c.b16 %v922, %v921
      %v927 = vunpack.c.l.b16 %v908
      %v928 = vunpack.c.h.b16 %v908
      %v929 = vunpack.c.l.b16 %v909
      %v930 = vunpack.c.h.b16 %v909
      %v931 = vpack.c.b16 %v929, %v927
      %v932 = vpack.c.b16 %v930, %v928
      %933 = vrot.lane.b32.xlu0 %v931, 119
      %v934 = vpop.permute.xlu0 %933
      %935 = vrot.lane.b32.xlu0 %v932, 119
      %v936 = vpop.permute.xlu0 %935
      %v937 = vsel %vm846, %v934, %v936
      %v940 = vsel %vm349, %v923, 0
      %v943 = vsel %vm349, %v924, 0
      %945 = vmatprep.subr.bf16.mxu0 0
      %946 = vmatpush1.bf16.msra.mxu0 0
      %947 = vmatprep.subr.bf16.mxu0 0
      %948 = vmatpush1.bf16.msra.mxu0 0
      %949 = vmatprep.subr.bf16.mxu0 0
      %950 = vmatpush1.bf16.msra.mxu0 0
      %951 = vmatprep.subr.bf16.mxu0 0
      %952 = vmatpush1.bf16.msra.mxu0 0
      %953 = vmatprep.subr.bf16.mxu0 0
      %954 = vmatpush1.bf16.msra.mxu0 0
      %955 = vmatprep.subr.bf16.mxu0 0
      %956 = vmatpush1.bf16.msra.mxu0 0
      %957 = vmatprep.subr.bf16.mxu0 0
      %958 = vmatpush1.bf16.msra.mxu0 0
      %959 = vmatprep.subr.bf16.mxu0 0
      %960 = vmatpush1.bf16.msra.mxu0 %v937
      %961 = vmatprep.subr.bf16.mxu0 0
      %962 = vmatpush2.bf16.msra.mxu0 0
      %963 = vmatprep.subr.bf16.mxu0 0
      %964 = vmatpush2.bf16.msra.mxu0 0
      %965 = vmatprep.subr.bf16.mxu0 0
      %966 = vmatpush2.bf16.msra.mxu0 0
      %967 = vmatprep.subr.bf16.mxu0 0
      %968 = vmatpush2.bf16.msra.mxu0 0
      %969 = vmatprep.subr.bf16.mxu0 0
      %970 = vmatpush2.bf16.msra.mxu0 0
      %971 = vmatprep.subr.bf16.mxu0 0
      %972 = vmatpush2.bf16.msra.mxu0 0
      %973 = vmatprep.subr.bf16.mxu0 0
      %974 = vmatpush2.bf16.msra.mxu0 0
      %975 = vmatprep.subr.bf16.mxu0 0
      %976 = vmatpush2.bf16.msra.mxu0 0
      %977 = vmatprep.mubr.bf16.mxu0 0
      %978 = vmatmul.mubr.bf16.gmra.mxu0 %v940
      %v979 = vpop.f32.mrf.mxu0
      %v980 = vadd.f32 0.0, %v979
      %v981 = vpop.f32.mrf.mxu0
      %v982 = vpop.f32.mrf.mxu0
      %v983 = vadd.f32 0.0, %v982
      %v984 = vpop.f32.mrf.mxu0
      %985 = vmatprep.mubr.bf16.mxu0 0
      %986 = vmatmul.mubr.bf16.gmra.mxu0 %v943
      %v987 = vpop.f32.mrf.mxu0
      %v988 = vadd.f32 0.0, %v987
      %v989 = vpop.f32.mrf.mxu0
      %v990 = vpop.f32.mrf.mxu0
      %v991 = vadd.f32 0.0, %v990
      %v992 = vpop.f32.mrf.mxu0
      %993 = vdwg.mxu0
      %v994 = vadd.f32 %v904, %v980
      %v995 = vadd.f32 %v905, %v983
      %v996 = vadd.f32 %v906, %v988
      %v997 = vadd.f32 %v907, %v991
      %s998 = scalar_lea.vmem %s1, 128
      %v999 = vld [vmem:[%s998] sm:$0xf]
      %v1000 = vld [vmem:[%s998 + $0x4] sm:$0xf]
      %v1001 = vld [vmem:[%s998 + $0x8] sm:$0xf]
      %v1002 = vld [vmem:[%s998 + $0xc] sm:$0xf]
      %v1007 = vunpack.c.l.b16 %v999
      %v1008 = vunpack.c.l.b16 %v1000
      %v1009 = vunpack.c.l.b16 %v1001
      %v1010 = vunpack.c.l.b16 %v1002
      %v1011 = vpack.c.b16 %v1008, %v1007
      %v1012 = vpack.c.b16 %v1010, %v1009
      %1013 = vrot.lane.b32.xlu0 %v499, 118
      %v1014 = vpop.permute.xlu0 %1013
      %1015 = vrot.lane.b32.xlu0 %v500, 118
      %v1016 = vpop.permute.xlu0 %1015
      %vm1017 = vcmask 965632
      %v1018 = vsel %vm1017, %v1014, %v1016
      %v1021 = vsel %vm349, %v1011, 0
      %v1024 = vsel %vm349, %v1012, 0
      %1026 = vmatprep.subr.bf16.mxu0 0
      %1027 = vmatpush1.bf16.msra.mxu0 0
      %1028 = vmatprep.subr.bf16.mxu0 0
      %1029 = vmatpush1.bf16.msra.mxu0 0
      %1030 = vmatprep.subr.bf16.mxu0 0
      %1031 = vmatpush1.bf16.msra.mxu0 0
      %1032 = vmatprep.subr.bf16.mxu0 0
      %1033 = vmatpush1.bf16.msra.mxu0 0
      %1034 = vmatprep.subr.bf16.mxu0 0
      %1035 = vmatpush1.bf16.msra.mxu0 0
      %1036 = vmatprep.subr.bf16.mxu0 0
      %1037 = vmatpush1.bf16.msra.mxu0 0
      %1038 = vmatprep.subr.bf16.mxu0 0
      %1039 = vmatpush1.bf16.msra.mxu0 0
      %1040 = vmatprep.subr.bf16.mxu0 0
      %1041 = vmatpush1.bf16.msra.mxu0 %v1018
      %1042 = vmatprep.subr.bf16.mxu0 0
      %1043 = vmatpush2.bf16.msra.mxu0 0
      %1044 = vmatprep.subr.bf16.mxu0 0
      %1045 = vmatpush2.bf16.msra.mxu0 0
      %1046 = vmatprep.subr.bf16.mxu0 0
      %1047 = vmatpush2.bf16.msra.mxu0 0
      %1048 = vmatprep.subr.bf16.mxu0 0
      %1049 = vmatpush2.bf16.msra.mxu0 0
      %1050 = vmatprep.subr.bf16.mxu0 0
      %1051 = vmatpush2.bf16.msra.mxu0 0
      %1052 = vmatprep.subr.bf16.mxu0 0
      %1053 = vmatpush2.bf16.msra.mxu0 0
      %1054 = vmatprep.subr.bf16.mxu0 0
      %1055 = vmatpush2.bf16.msra.mxu0 0
      %1056 = vmatprep.subr.bf16.mxu0 0
      %1057 = vmatpush2.bf16.msra.mxu0 0
      %1058 = vmatprep.mubr.bf16.mxu0 0
      %1059 = vmatmul.mubr.bf16.gmra.mxu0 %v1021
      %v1060 = vpop.f32.mrf.mxu0
      %v1061 = vadd.f32 0.0, %v1060
      %v1062 = vpop.f32.mrf.mxu0
      %v1063 = vpop.f32.mrf.mxu0
      %v1064 = vadd.f32 0.0, %v1063
      %v1065 = vpop.f32.mrf.mxu0
      %1066 = vmatprep.mubr.bf16.mxu0 0
      %1067 = vmatmul.mubr.bf16.gmra.mxu0 %v1024
      %v1068 = vpop.f32.mrf.mxu0
      %v1069 = vadd.f32 0.0, %v1068
      %v1070 = vpop.f32.mrf.mxu0
      %v1071 = vpop.f32.mrf.mxu0
      %v1072 = vadd.f32 0.0, %v1071
      %v1073 = vpop.f32.mrf.mxu0
      %1074 = vdwg.mxu0
      %v1075 = vadd.f32 %v994, %v1061
      %v1076 = vadd.f32 %v995, %v1064
      %v1077 = vadd.f32 %v996, %v1069
      %v1078 = vadd.f32 %v997, %v1072
      %1080 = vset.pattern.permute.xlu0 0
      %1081 = vperm.xlu0 %1080, %v310
      %v1082 = vpop.permute.xlu0 %1081
      %1085 = vset.pattern.permute.xlu0 0
      %1086 = vperm.xlu0 %1085, %v311
      %v1087 = vpop.permute.xlu0 %1086
      %1090 = vset.pattern.permute.xlu0 0
      %1091 = vperm.xlu0 %1090, %v312
      %v1092 = vpop.permute.xlu0 %1091
      %1095 = vset.pattern.permute.xlu0 0
      %1096 = vperm.xlu0 %1095, %v313
      %v1097 = vpop.permute.xlu0 %1096
      %v1099 = vadd.f32 %v1075, %v1082
      %v1100 = vadd.f32 %v1076, %v1087
      %v1101 = vadd.f32 %v1077, %v1092
      %v1102 = vadd.f32 %v1078, %v1097
      %v1103 = vmax.f32 %v1099, 0.0
      %v1104 = vmax.f32 %v1100, 0.0
      %v1105 = vmax.f32 %v1101, 0.0
      %v1106 = vmax.f32 %v1102, 0.0
      %v1107 = vpack.c.bf16 %v1104, %v1103
      %v1108 = vpack.c.bf16 %v1106, %v1105
      %v1111 = vunpack.c.l.b16 %v1107
      %v1112 = vunpack.c.h.b16 %v1107
      %v1113 = vunpack.c.l.b16 %v1108
      %v1114 = vunpack.c.h.b16 %v1108
      %v1115 = vpack.c.b16 %v1111, %v1111
      %v1116 = vpack.c.b16 %v1112, %v1112
      %v1117 = vpack.c.b16 %v1113, %v1113
      %v1118 = vpack.c.b16 %v1114, %v1114
      %1123 = vst [vmem:[%s144] sm:$0xf] %v1115
      %1124 = vst [vmem:[%s144 + $0x4] sm:$0xf] %v1116
      %1125 = vst [vmem:[%s144 + $0x8] sm:$0xf] %v1117
      %1126 = vst [vmem:[%s144 + $0xc] sm:$0xf] %v1118
      %p1127 = scmp.lt.s32.totalorder %s18, 1
      %s1128 = scalar_select %p1127, %s18, 1
      %p1129 = scmp.lt.s32.totalorder %s19, 0
      %s1130 = scalar_select %p1129, %s19, 0
      %s1131 = smul.addr %s1128, 4
      %s1132 = sadd.s32 %s1130, %s1131
      %s1133 = smul.addr %s1132, 4
      %s1134 = scalar_lea.vmem %s3, %s1133
      // Predicated region
      $region105: #{down4_forward.1} parent=27 // pred_check
        %p1135 = pneg %p88
      $region106: #{down4_forward.1} parent=27 // pred_check_branch
        %1137 = sbr.rel (%p1135) target = $region108
      $region107: #{down4_forward.1} parent=27 // pred_region
        _
      $region108: #{down4_forward.1} parent=27 // pred_fallthru
        _
    $region28: #{down4_forward.1} parent=5 // pred_fallthru
      _
    %p1138 = scmp.le.s32.totalorder 2, %s9
    // Predicated region
    $region109: #{down4_forward.1} parent=5 // pred_check
      %p1139 = pneg %p1138
    $region110: #{down4_forward.1} parent=5 // pred_check_branch
      %1141 = sbr.rel (%p1139) target = $region112
    $region111: #{down4_forward.1} parent=5 // pred_region
      %s1142 = ssub.s32 %s9, 2
      // Predicated region
      $region113: #{down4_forward.1} parent=111 // pred_check
        %p1143 = pneg %p94
      $region114: #{down4_forward.1} parent=111 // pred_check_branch
        %1145 = sbr.rel (%p1143) target = $region116
      $region115: #{down4_forward.1} parent=111 // pred_region
        %p1146 = scmp.lt.s32.totalorder %s20, 1
        %s1147 = scalar_select %p1146, %s20, 1
        %p1148 = scmp.lt.s32.totalorder %s21, 0
        %s1149 = scalar_select %p1148, %s21, 0
        %s1150 = smul.addr %s1147, 4
        %s1151 = sadd.s32 %s1149, %s1150
        %s1152 = smul.addr %s1151, 4
        %s1153 = scalar_lea.vmem %s3, %s1152
      $region116: #{down4_forward.1} parent=111 // pred_fallthru
        _
    $region112: #{down4_forward.1} parent=5 // pred_fallthru
      _
  $region6: #{down4_forward.1} parent=0 // loop_footer
    %s13 = sadd.s32 1, %s9
  $region7: #{down4_forward.1} parent=0 // loop_footer_branch
    %8 = sbr.rel target = $region3
  $region8: #{down4_forward.1} parent=0 // loop_exit
    _
  %1154 = vsyncmov [#allocation3]
  %s1155 = vpop.sfrf %1154
  %p1156 = scmp.eq.s32.totalorder %s1155, 0
  %p1157 = pneg %p1156
  %1159 = shalt.err (%p1157)
  %s1160 = scalar_lea.sflag [#allocation3], 1
  %1161 = vsyncmov %s1160
  %s1162 = vpop.sfrf %1161
  %p1163 = scmp.eq.s32.totalorder %s1162, 0
  %p1164 = pneg %p1163
  %1166 = shalt.err (%p1164)

</llo_original>
